<compile_context>
chip_gen: v6e
topology: v6e:2x2x1
jax: 0.10.0
libtpu: 0.0.40
codegen_flags: <defaults>
</compile_context>

<pallas_src>
from functools import partial

import jax
import jax.numpy as jnp
from jax.experimental import pallas as pl
from jax.experimental.pallas import tpu as pltpu


# ----------------------------------------------------------------------------
# Fused kernel: one grid step == B_blk samples, lane-concatenated (C, B*HW)
# ----------------------------------------------------------------------------
def _cond_block_kernel(*refs, B_blk, H, W, cr1, cr2, use_res_conv):
    if use_res_conv:
        (x_ref, fmul_ref, fadd_ref, masks_ref,
         w_ds_ref, b_ds_ref, gn1_w_ref, gn1_b_ref,
         w_c1_ref, b_c1_ref, gn2_w_ref, gn2_b_ref,
         w_c2_ref, b_c2_ref, w_res_ref, b_res_ref, out_ref) = refs
    else:
        (x_ref, fmul_ref, fadd_ref, masks_ref,
         w_ds_ref, b_ds_ref, gn1_w_ref, gn1_b_ref,
         w_c1_ref, b_c1_ref, gn2_w_ref, gn2_b_ref,
         w_c2_ref, b_c2_ref, out_ref) = refs
        w_res_ref = b_res_ref = None

    HW = H * W
    L = B_blk * HW
    f32, bf16 = jnp.float32, jnp.bfloat16

    # Edge-validity masks (9, 1, L) bf16 — loaded once, shared by all convs.
    masks = masks_ref[...]

    def im2col(h_bf):
        """(C_p, L) bf16 -> (9*C_p, L) bf16 shifted-tap slab, bf16-native.

        Samples are concatenated along lanes; any roll that wraps across a
        sample (or block) boundary only hits positions the edge mask zeroes.
        """
        # TODO(synk): on v5e keep the roll/mask math in f32 (no bf16 VPU there).
        taps = []
        for k in range(9):
            oy, ox = k // 3 - 1, k % 3 - 1
            off = oy * W + ox
            if off == 0:
                taps.append(h_bf)
            else:
                taps.append(jnp.roll(h_bf, -off, axis=1) * masks[k])
        # C_p is a multiple of 16 -> aligned bf16 sublane concat, no repack
        return jnp.concatenate(taps, axis=0)

    def conv3x3(h_bf, w_ref, b_ref):
        # ONE wide-K MXU matmul per conv over the whole sample block
        # TODO(synk): for production Ci/Cmid >= 128 switch to 9 accumulated
        # K=Ci matmuls (no (9*Ci, L) patch slab) — better under v7x's 64 MiB.
        return (jnp.dot(w_ref[...], im2col(h_bf),
                        preferred_element_type=f32) + b_ref[...])

    def gnorm(h, g_ref, b_ref, c_real, eps=1e-5):
        """GroupNorm(1, C): single-pass per-sample stats (lane segments).

        Relies on padded channel rows being exactly zero (see header note);
        divide by the REAL element count c_real * HW.
        """
        s1 = jnp.sum(h, axis=0, keepdims=True)           # (1, L)
        s2 = jnp.sum(h * h, axis=0, keepdims=True)       # (1, L)
        s1 = jnp.sum(s1.reshape(1, B_blk, HW), axis=2, keepdims=True)  # (1,B,1)
        s2 = jnp.sum(s2.reshape(1, B_blk, HW), axis=2, keepdims=True)
        n = float(c_real * HW)
        mean = s1 / n
        var = s2 / n - mean * mean
        inv = jax.lax.rsqrt(var + eps)
        mean_row = jnp.broadcast_to(mean, (1, B_blk, HW)).reshape(1, L)
        inv_row = jnp.broadcast_to(inv, (1, B_blk, HW)).reshape(1, L)
        return (h - mean_row) * inv_row * g_ref[...] + b_ref[...]

    def gelu(v):
        # tanh approximation (EUP tanh instead of a long VPU erf polynomial);
        # small systematic deviation vs the module's exact erf GELU.
        c = 0.7978845608028654
        return 0.5 * v * (1.0 + jnp.tanh(c * (v + 0.044715 * v * v * v)))

    x_f = x_ref[...]                        # (Cin_p, L) f32
    x_bf = x_f.astype(bf16)                 # cast once; reused by ds + res conv

    # ---- h = ds_conv(x); FiLM (pre-broadcast lane-dense slabs) ----
    h = conv3x3(x_bf, w_ds_ref, b_ds_ref)   # (Cout_p, L) f32
    h = h * fmul_ref[...] + fadd_ref[...]   # fmul = 1 + scale, fadd = shift

    # ---- GN -> conv3x3 -> GELU -> GN -> conv3x3 ----
    h = gnorm(h, gn1_w_ref, gn1_b_ref, cr1)
    h = gelu(conv3x3(h.astype(bf16), w_c1_ref, b_c1_ref))   # (Cmid_p, L)
    h = gnorm(h, gn2_w_ref, gn2_b_ref, cr2)
    h = conv3x3(h.astype(bf16), w_c2_ref, b_c2_ref)          # (Cout_p, L)

    # ---- residual branch ----
    if use_res_conv:
        res = (jnp.dot(w_res_ref[...], x_bf, preferred_element_type=f32)
               + b_res_ref[...])
    else:
        res = x_f                            # identity (Cin == Cout)

    out_ref[...] = (h + res).astype(out_ref.dtype)


# ----------------------------------------------------------------------------
# Per-generation VMEM budgets (64 MiB / TC on v7x, 128 MiB on v5e/v6e)
# ----------------------------------------------------------------------------
def _vmem_budgets():
    cap = None
    try:
        cap = getattr(pltpu.get_tpu_info(), "vmem_capacity_bytes", None)
    except Exception:
        cap = None
    if cap is None:
        cap = 64 << 20                       # conservative default (v7x-class)
    if cap <= (64 << 20):                    # v7x: 64 MiB per TensorCore
        return 18 << 20, 40 << 20            # (block-picker budget, vmem_limit)
    return 64 << 20, 100 << 20               # v5e / v6e: 128 MiB


# ----------------------------------------------------------------------------
# Batch-block picker: largest divisor of N under the VMEM budget and max_blk
# ----------------------------------------------------------------------------
def _pick_batch_block(N, cin_p, cout_p, cmid_p, hw, budget_bytes, max_blk):
    cmax = max(cin_p, cout_p, cmid_p)
    # block-invariant operands (weights/biases/GN params), double-buffered
    fixed = 2 * (2 * 9 * (cout_p * cin_p + cmid_p * cout_p + cout_p * cmid_p)
                 + 2 * cout_p * cin_p + 4 * 8 * cmax)
    per_sample = hw * (
        4 * 2 * (cin_p + 3 * cout_p)         # double-buffered x/film0/film1/out
        + 4 * (2 * cout_p + cmid_p)          # live f32 activation slabs
        + 2 * cin_p                          # bf16 copy of x
        + 2 * 9 * (cmax + 1)                 # widest bf16 im2col patch + masks
        + 64)                                # stat rows / slack
    avail = max(budget_bytes - fixed, 0)
    cap = int(max(1, min(avail // per_sample, max_blk, N)))
    for d in range(cap, 0, -1):
        if N % d == 0:
            return d
    return 1


# ----------------------------------------------------------------------------
# Wrapper: layout plumbing + pallas_call
# ----------------------------------------------------------------------------
def conditional_block(x_nchw, cond_emb, params, *, mult):
    N, Cin, H, W = x_nchw.shape
    Cout = params["b_ds"].shape[-1]
    Cmid = Cout * mult
    HW = H * W
    use_res_conv = (Cin != Cout)

    # bf16 packs 2 rows per sublane -> pad every channel count to 16 so taps /
    # matmul K dims / sublane concats are (16,128)-tile aligned.
    rnd16 = lambda c: -(-c // 16) * 16
    Cin_p, Cout_p, Cmid_p = rnd16(Cin), rnd16(Cout), rnd16(Cmid)

    f32, bf16 = jnp.float32, jnp.bfloat16

    # ---- VMEM budgets + batch blocking (keep >= 2 grid steps for v7x) ----
    budget, vmem_limit = _vmem_budgets()
    B_blk = _pick_batch_block(N, Cin_p, Cout_p, Cmid_p, HW, budget,
                              max_blk=max(1, N // 2))
    if (B_blk * HW) % 128 != 0 and B_blk != N:
        B_blk = N                            # fall back to full-extent lane block
    L = B_blk * HW

    # ---- activations: channels on sublanes, (sample, spatial) on lanes ----
    x_slab = jnp.transpose(x_nchw.astype(f32).reshape(N, Cin, HW), (1, 0, 2))
    x_slab = jnp.pad(x_slab, ((0, Cin_p - Cin), (0, 0), (0, 0)))
    x_slab = x_slab.reshape(Cin_p, N * HW)

    # ---- FiLM MLP hoisted out of the kernel (exact erf GELU, one matmul) ----
    y = jax.nn.gelu(
        jnp.dot(cond_emb.astype(f32), params["w_mlp"].astype(f32),
                precision=jax.lax.Precision.HIGHEST),
        approximate=False)                                   # (N, 2*Cout)
    scale, shift = y[:, :Cout], y[:, Cout:]

    def film_slab(v):          # (N, Cout) -> lane-dense (Cout_p, N*HW) f32
        v = jnp.pad(v.T.astype(f32), ((0, Cout_p - Cout), (0, 0)))   # (Cout_p, N)
        return jnp.broadcast_to(v[:, :, None],
                                (Cout_p, N, HW)).reshape(Cout_p, N * HW)

    film_mul = film_slab(1.0 + scale)        # padded channel rows are 0
    film_add = film_slab(shift)

    # ---- 3x3 "SAME" edge masks, computed once, tiled over the sample block ----
    rows = jnp.arange(HW, dtype=jnp.int32) // W
    cols = jnp.arange(HW, dtype=jnp.int32) % W
    mask_list = []
    for k in range(9):
        oy, ox = k // 3 - 1, k % 3 - 1
        mask_list.append((rows + oy >= 0) & (rows + oy < H) &
                         (cols + ox >= 0) & (cols + ox < W))
    masks = jnp.stack(mask_list).astype(bf16)                # (9, HW)
    masks = jnp.tile(masks, (1, B_blk)).reshape(9, 1, L)

    # ---- weights: HWIO (3,3,Ci,Co) -> bf16 im2col matrices (Co_p, 9*Ci_p) ----
    def conv_w(w_hwio, ci_p, co_p):
        _, _, ci, co = w_hwio.shape
        w = jnp.transpose(w_hwio.astype(f32), (3, 0, 1, 2))          # (Co,3,3,Ci)
        w = jnp.pad(w, ((0, co_p - co), (0, 0), (0, 0), (0, ci_p - ci)))
        return w.reshape(co_p, 9 * ci_p).astype(bf16)

    def col(v, c_p):                                                 # (C,)->(C_p,1)
        return jnp.pad(v.astype(f32), (0, c_p - v.shape[0])).reshape(c_p, 1)

    operands = [
        x_slab, film_mul, film_add, masks,
        conv_w(params["w_ds"], Cin_p, Cout_p), col(params["b_ds"], Cout_p),
        col(params["gn1_w"], Cout_p), col(params["gn1_b"], Cout_p),
        conv_w(params["w_c1"], Cout_p, Cmid_p), col(params["b_c1"], Cmid_p),
        col(params["gn2_w"], Cmid_p), col(params["gn2_b"], Cmid_p),
        conv_w(params["w_c2"], Cmid_p, Cout_p), col(params["b_c2"], Cout_p),
    ]
    if use_res_conv:
        w_res = jnp.pad(params["w_res"].astype(f32).T,
                        ((0, Cout_p - Cout), (0, Cin_p - Cin))).astype(bf16)
        operands += [w_res, col(params["b_res"], Cout_p)]

    lane_spec = lambda c_p: pl.BlockSpec((c_p, L), lambda n: (0, n))

    def full_spec(a):
        return pl.BlockSpec(a.shape, lambda n, _nd=a.ndim: (0,) * _nd)

    in_specs = ([lane_spec(Cin_p), lane_spec(Cout_p), lane_spec(Cout_p)] +
                [full_spec(a) for a in operands[3:]])
    # TODO(synk): single-buffer the block-invariant weight operands
    # (pipeline_mode=pl.Buffered(1)) once validated on-device; frees ~half the
    # weight VMEM at production channel counts.

    kernel = partial(_cond_block_kernel, B_blk=B_blk, H=H, W=W,
                     cr1=Cout, cr2=Cmid, use_res_conv=use_res_conv)

    out = pl.pallas_call(
        kernel,
        out_shape=jax.ShapeDtypeStruct((Cout_p, N * HW), f32),
        grid_spec=pltpu.PrefetchScalarGridSpec(
            num_scalar_prefetch=0,
            grid=(N // B_blk,),
            in_specs=in_specs,
            out_specs=pl.BlockSpec((Cout_p, L), lambda n: (0, n)),
        ),
        compiler_params=pltpu.CompilerParams(
            dimension_semantics=("parallel",),
            vmem_limit_bytes=vmem_limit,
        ),
    )(*operands)

    # drop channel padding; back to NCHW (wrapper-side layout plumbing)
    out = out[:Cout].reshape(Cout, N, HW)
    return jnp.transpose(out, (1, 0, 2)).reshape(N, Cout, H, W)


# ----------------------------------------------------------------------------
# Pure-JAX reference (mirrors the PyTorch module exactly, f32 / exact GELU)
# ----------------------------------------------------------------------------
def _reference(x, cond, p, *, mult, use_res_conv):
    prec = jax.lax.Precision.HIGHEST

    def conv3x3(h, w_hwio, b):
        out = jax.lax.conv_general_dilated(
            h, w_hwio, window_strides=(1, 1), padding="SAME",
            dimension_numbers=("NCHW", "HWIO", "NCHW"), precision=prec)
        return out + b.reshape(1, -1, 1, 1)

    def gn(h, w, b, eps=1e-5):
        mean = jnp.mean(h, axis=(1, 2, 3), keepdims=True)
        var = jnp.mean(jnp.square(h - mean), axis=(1, 2, 3), keepdims=True)
        return ((h - mean) * jax.lax.rsqrt(var + eps)
                * w.reshape(1, -1, 1, 1) + b.reshape(1, -1, 1, 1))

    gelu = lambda v: jax.nn.gelu(v, approximate=False)

    h = conv3x3(x, p["w_ds"], p["b_ds"])
    y = gelu(jnp.dot(cond, p["w_mlp"], precision=prec))
    cout = p["b_ds"].shape[-1]
    scale, shift = y[:, :cout], y[:, cout:]
    h = h * (1.0 + scale[:, :, None, None]) + shift[:, :, None, None]
    h = gn(h, p["gn1_w"], p["gn1_b"])
    h = conv3x3(h, p["w_c1"], p["b_c1"])
    h = gelu(h)
    h = gn(h, p["gn2_w"], p["gn2_b"])
    h = conv3x3(h, p["w_c2"], p["b_c2"])
    if use_res_conv:
        res = (jnp.einsum("nchw,cd->ndhw", x, p["w_res"], precision=prec)
               + p["b_res"].reshape(1, -1, 1, 1))
    else:
        res = x
    return h + res


# ----------------------------------------------------------------------------
if __name__ == "__main__":
    key = jax.random.PRNGKey(0)
    N, Cin, H, W = 2, 4, 16, 16
    Cout, cond_dim, mult = 8, 32, 2
    Cmid = Cout * mult
    ks = jax.random.split(key, 16)

    def rnd(k, shape, scale=0.2):
        return (scale * jax.random.normal(k, shape)).astype(jnp.float32)

    # Deterministic synthetic parameters (shapes follow the nn.Module __init__).
    params = {
        "w_mlp": rnd(ks[0], (cond_dim, 2 * Cout)),   # Linear(cond_dim, 2*out_ch, bias=False)
        "w_ds":  rnd(ks[1], (3, 3, Cin, Cout)),      # HWIO
        "b_ds":  rnd(ks[2], (Cout,)),
        "gn1_w": (1.0 + rnd(ks[3], (Cout,))).astype(jnp.float32),
        "gn1_b": rnd(ks[4], (Cout,)),
        "w_c1":  rnd(ks[5], (3, 3, Cout, Cmid)),
        "b_c1":  rnd(ks[6], (Cmid,)),
        "gn2_w": (1.0 + rnd(ks[7], (Cmid,))).astype(jnp.float32),
        "gn2_b": rnd(ks[8], (Cmid,)),
        "w_c2":  rnd(ks[9], (3, 3, Cmid, Cout)),
        "b_c2":  rnd(ks[10], (Cout,)),
        "w_res": rnd(ks[11], (Cin, Cout)),           # 1x1 conv as (Cin, Cout)
        "b_res": rnd(ks[12], (Cout,)),
    }

    x = jax.random.normal(ks[13], (N, Cin, H, W), dtype=jnp.float32)
    cond_emb = jax.random.normal(ks[14], (N, cond_dim), dtype=jnp.float32)

    out = conditional_block(x, cond_emb, params, mult=mult)
    out = jax.block_until_ready(out)

    ref = _reference(x, cond_emb, params, mult=mult, use_res_conv=(Cin != Cout))
    max_err = float(jnp.max(jnp.abs(out - ref)))
    mean_err = float(jnp.mean(jnp.abs(out - ref)))
    assert out.shape == (N, Cout, H, W), out.shape
    # bf16 matmul operands + tanh-GELU in the conv path -> relaxed tolerance
    # against the exact-f32 / erf-GELU reference.
    assert max_err < 1e-1, f"max abs err = {max_err}"
    assert mean_err < 2e-2, f"mean abs err = {mean_err}"
    print("KERNEL_OK")
</pallas_src>

<mosaic_0001>
module attributes {stable_mosaic.version = 11 : i64} {
  func.func @_cond_block_kernel(%arg0: i32, %arg1: memref<16x256xf32, #tpu.memory_space<vmem>>, %arg2: memref<16x256xf32, #tpu.memory_space<vmem>>, %arg3: memref<16x256xf32, #tpu.memory_space<vmem>>, %arg4: memref<9x1x256xbf16, #tpu.memory_space<vmem>>, %arg5: memref<16x144xbf16, #tpu.memory_space<vmem>>, %arg6: memref<16x1xf32, #tpu.memory_space<vmem>>, %arg7: memref<16x1xf32, #tpu.memory_space<vmem>>, %arg8: memref<16x1xf32, #tpu.memory_space<vmem>>, %arg9: memref<16x144xbf16, #tpu.memory_space<vmem>>, %arg10: memref<16x1xf32, #tpu.memory_space<vmem>>, %arg11: memref<16x1xf32, #tpu.memory_space<vmem>>, %arg12: memref<16x1xf32, #tpu.memory_space<vmem>>, %arg13: memref<16x144xbf16, #tpu.memory_space<vmem>>, %arg14: memref<16x1xf32, #tpu.memory_space<vmem>>, %arg15: memref<16x16xbf16, #tpu.memory_space<vmem>>, %arg16: memref<16x1xf32, #tpu.memory_space<vmem>>, %arg17: memref<16x256xf32, #tpu.memory_space<vmem>>) attributes {dimension_semantics = [#tpu.dimension_semantics<parallel>], iteration_bounds = array<i64: 2>, scalar_prefetch = 0 : i64, scratch_operands = 0 : i64, tpu.core_type = #tpu.core_type<tc>, window_params = [{transform_indices = @transform_0, window_bounds = array<i64: 16, 256>}, {transform_indices = @transform_1, window_bounds = array<i64: 16, 256>}, {transform_indices = @transform_2, window_bounds = array<i64: 16, 256>}, {pipeline_mode = #tpu.pipeline_mode<synchronous>, transform_indices = @transform_3, window_bounds = array<i64: 9, 1, 256>}, {pipeline_mode = #tpu.pipeline_mode<synchronous>, transform_indices = @transform_4, window_bounds = array<i64: 16, 144>}, {pipeline_mode = #tpu.pipeline_mode<synchronous>, transform_indices = @transform_5, window_bounds = array<i64: 16, 1>}, {pipeline_mode = #tpu.pipeline_mode<synchronous>, transform_indices = @transform_6, window_bounds = array<i64: 16, 1>}, {pipeline_mode = #tpu.pipeline_mode<synchronous>, transform_indices = @transform_7, window_bounds = array<i64: 16, 1>}, {pipeline_mode = #tpu.pipeline_mode<synchronous>, transform_indices = @transform_8, window_bounds = array<i64: 16, 144>}, {pipeline_mode = #tpu.pipeline_mode<synchronous>, transform_indices = @transform_9, window_bounds = array<i64: 16, 1>}, {pipeline_mode = #tpu.pipeline_mode<synchronous>, transform_indices = @transform_10, window_bounds = array<i64: 16, 1>}, {pipeline_mode = #tpu.pipeline_mode<synchronous>, transform_indices = @transform_11, window_bounds = array<i64: 16, 1>}, {pipeline_mode = #tpu.pipeline_mode<synchronous>, transform_indices = @transform_12, window_bounds = array<i64: 16, 144>}, {pipeline_mode = #tpu.pipeline_mode<synchronous>, transform_indices = @transform_13, window_bounds = array<i64: 16, 1>}, {pipeline_mode = #tpu.pipeline_mode<synchronous>, transform_indices = @transform_14, window_bounds = array<i64: 16, 16>}, {pipeline_mode = #tpu.pipeline_mode<synchronous>, transform_indices = @transform_15, window_bounds = array<i64: 16, 1>}, {transform_indices = @transform_16, window_bounds = array<i64: 16, 256>}]} {
    %c0 = arith.constant 0 : index
    %c0_0 = arith.constant 0 : index
    %c0_1 = arith.constant 0 : index
    %0 = vector.load %arg4[%c0, %c0_0, %c0_1] : memref<9x1x256xbf16, #tpu.memory_space<vmem>>, vector<9x1x256xbf16>
    %c0_2 = arith.constant 0 : index
    %c0_3 = arith.constant 0 : index
    %1 = vector.load %arg1[%c0_2, %c0_3] : memref<16x256xf32, #tpu.memory_space<vmem>>, vector<16x256xf32>
    %2 = arith.truncf %1 : vector<16x256xf32> to vector<16x256xbf16>
    %c0_4 = arith.constant 0 : index
    %c0_5 = arith.constant 0 : index
    %3 = vector.load %arg5[%c0_4, %c0_5] : memref<16x144xbf16, #tpu.memory_space<vmem>>, vector<16x144xbf16>
    %4 = vector.extract_strided_slice %2 {offsets = [0, 239], sizes = [16, 17], strides = [1, 1]} : vector<16x256xbf16> to vector<16x17xbf16>
    %5 = vector.extract_strided_slice %2 {offsets = [0, 0], sizes = [16, 239], strides = [1, 1]} : vector<16x256xbf16> to vector<16x239xbf16>
    %6 = tpu.concatenate %4, %5 in 1 : vector<16x17xbf16>, vector<16x239xbf16> -> vector<16x256xbf16>
    %7 = vector.extract_strided_slice %0 {offsets = [0, 0, 0], sizes = [1, 1, 256], strides = [1, 1, 1]} : vector<9x1x256xbf16> to vector<1x1x256xbf16>
    %8 = vector.shape_cast %7 : vector<1x1x256xbf16> to vector<1x256xbf16>
    %9 = vector.broadcast %8 : vector<1x256xbf16> to vector<16x256xbf16>
    %10 = arith.mulf %6, %9 : vector<16x256xbf16>
    %11 = vector.extract_strided_slice %2 {offsets = [0, 240], sizes = [16, 16], strides = [1, 1]} : vector<16x256xbf16> to vector<16x16xbf16>
    %12 = vector.extract_strided_slice %2 {offsets = [0, 0], sizes = [16, 240], strides = [1, 1]} : vector<16x256xbf16> to vector<16x240xbf16>
    %13 = tpu.concatenate %11, %12 in 1 : vector<16x16xbf16>, vector<16x240xbf16> -> vector<16x256xbf16>
    %14 = vector.extract_strided_slice %0 {offsets = [1, 0, 0], sizes = [1, 1, 256], strides = [1, 1, 1]} : vector<9x1x256xbf16> to vector<1x1x256xbf16>
    %15 = vector.shape_cast %14 : vector<1x1x256xbf16> to vector<1x256xbf16>
    %16 = vector.broadcast %15 : vector<1x256xbf16> to vector<16x256xbf16>
    %17 = arith.mulf %13, %16 : vector<16x256xbf16>
    %18 = vector.extract_strided_slice %2 {offsets = [0, 241], sizes = [16, 15], strides = [1, 1]} : vector<16x256xbf16> to vector<16x15xbf16>
    %19 = vector.extract_strided_slice %2 {offsets = [0, 0], sizes = [16, 241], strides = [1, 1]} : vector<16x256xbf16> to vector<16x241xbf16>
    %20 = tpu.concatenate %18, %19 in 1 : vector<16x15xbf16>, vector<16x241xbf16> -> vector<16x256xbf16>
    %21 = vector.extract_strided_slice %0 {offsets = [2, 0, 0], sizes = [1, 1, 256], strides = [1, 1, 1]} : vector<9x1x256xbf16> to vector<1x1x256xbf16>
    %22 = vector.shape_cast %21 : vector<1x1x256xbf16> to vector<1x256xbf16>
    %23 = vector.broadcast %22 : vector<1x256xbf16> to vector<16x256xbf16>
    %24 = arith.mulf %20, %23 : vector<16x256xbf16>
    %25 = vector.extract_strided_slice %2 {offsets = [0, 255], sizes = [16, 1], strides = [1, 1]} : vector<16x256xbf16> to vector<16x1xbf16>
    %26 = vector.extract_strided_slice %2 {offsets = [0, 0], sizes = [16, 255], strides = [1, 1]} : vector<16x256xbf16> to vector<16x255xbf16>
    %27 = tpu.concatenate %25, %26 in 1 : vector<16x1xbf16>, vector<16x255xbf16> -> vector<16x256xbf16>
    %28 = vector.extract_strided_slice %0 {offsets = [3, 0, 0], sizes = [1, 1, 256], strides = [1, 1, 1]} : vector<9x1x256xbf16> to vector<1x1x256xbf16>
    %29 = vector.shape_cast %28 : vector<1x1x256xbf16> to vector<1x256xbf16>
    %30 = vector.broadcast %29 : vector<1x256xbf16> to vector<16x256xbf16>
    %31 = arith.mulf %27, %30 : vector<16x256xbf16>
    %32 = vector.extract_strided_slice %2 {offsets = [0, 1], sizes = [16, 255], strides = [1, 1]} : vector<16x256xbf16> to vector<16x255xbf16>
    %33 = vector.extract_strided_slice %2 {offsets = [0, 0], sizes = [16, 1], strides = [1, 1]} : vector<16x256xbf16> to vector<16x1xbf16>
    %34 = tpu.concatenate %32, %33 in 1 : vector<16x255xbf16>, vector<16x1xbf16> -> vector<16x256xbf16>
    %35 = vector.extract_strided_slice %0 {offsets = [5, 0, 0], sizes = [1, 1, 256], strides = [1, 1, 1]} : vector<9x1x256xbf16> to vector<1x1x256xbf16>
    %36 = vector.shape_cast %35 : vector<1x1x256xbf16> to vector<1x256xbf16>
    %37 = vector.broadcast %36 : vector<1x256xbf16> to vector<16x256xbf16>
    %38 = arith.mulf %34, %37 : vector<16x256xbf16>
    %39 = vector.extract_strided_slice %2 {offsets = [0, 15], sizes = [16, 241], strides = [1, 1]} : vector<16x256xbf16> to vector<16x241xbf16>
    %40 = vector.extract_strided_slice %2 {offsets = [0, 0], sizes = [16, 15], strides = [1, 1]} : vector<16x256xbf16> to vector<16x15xbf16>
    %41 = tpu.concatenate %39, %40 in 1 : vector<16x241xbf16>, vector<16x15xbf16> -> vector<16x256xbf16>
    %42 = vector.extract_strided_slice %0 {offsets = [6, 0, 0], sizes = [1, 1, 256], strides = [1, 1, 1]} : vector<9x1x256xbf16> to vector<1x1x256xbf16>
    %43 = vector.shape_cast %42 : vector<1x1x256xbf16> to vector<1x256xbf16>
    %44 = vector.broadcast %43 : vector<1x256xbf16> to vector<16x256xbf16>
    %45 = arith.mulf %41, %44 : vector<16x256xbf16>
    %46 = vector.extract_strided_slice %2 {offsets = [0, 16], sizes = [16, 240], strides = [1, 1]} : vector<16x256xbf16> to vector<16x240xbf16>
    %47 = vector.extract_strided_slice %2 {offsets = [0, 0], sizes = [16, 16], strides = [1, 1]} : vector<16x256xbf16> to vector<16x16xbf16>
    %48 = tpu.concatenate %46, %47 in 1 : vector<16x240xbf16>, vector<16x16xbf16> -> vector<16x256xbf16>
    %49 = vector.extract_strided_slice %0 {offsets = [7, 0, 0], sizes = [1, 1, 256], strides = [1, 1, 1]} : vector<9x1x256xbf16> to vector<1x1x256xbf16>
    %50 = vector.shape_cast %49 : vector<1x1x256xbf16> to vector<1x256xbf16>
    %51 = vector.broadcast %50 : vector<1x256xbf16> to vector<16x256xbf16>
    %52 = arith.mulf %48, %51 : vector<16x256xbf16>
    %53 = vector.extract_strided_slice %2 {offsets = [0, 17], sizes = [16, 239], strides = [1, 1]} : vector<16x256xbf16> to vector<16x239xbf16>
    %54 = vector.extract_strided_slice %2 {offsets = [0, 0], sizes = [16, 17], strides = [1, 1]} : vector<16x256xbf16> to vector<16x17xbf16>
    %55 = tpu.concatenate %53, %54 in 1 : vector<16x239xbf16>, vector<16x17xbf16> -> vector<16x256xbf16>
    %56 = vector.extract_strided_slice %0 {offsets = [8, 0, 0], sizes = [1, 1, 256], strides = [1, 1, 1]} : vector<9x1x256xbf16> to vector<1x1x256xbf16>
    %57 = vector.shape_cast %56 : vector<1x1x256xbf16> to vector<1x256xbf16>
    %58 = vector.broadcast %57 : vector<1x256xbf16> to vector<16x256xbf16>
    %59 = arith.mulf %55, %58 : vector<16x256xbf16>
    %60 = tpu.concatenate %10, %17, %24, %31, %2, %38, %45, %52, %59 in 0 : vector<16x256xbf16>, vector<16x256xbf16>, vector<16x256xbf16>, vector<16x256xbf16>, vector<16x256xbf16>, vector<16x256xbf16>, vector<16x256xbf16>, vector<16x256xbf16>, vector<16x256xbf16> -> vector<144x256xbf16>
    %cst = arith.constant dense<0.000000e+00> : vector<16x256xf32>
    %61 = tpu.matmul %3, %60, %cst {dimension_numbers = #tpu.dot_dimension_numbers<[1], [0], [0], [1], [0, 0, 1, 1], [], []>} : vector<16x144xbf16>, vector<144x256xbf16>, vector<16x256xf32> -> vector<16x256xf32>
    %c0_6 = arith.constant 0 : index
    %c0_7 = arith.constant 0 : index
    %62 = vector.load %arg6[%c0_6, %c0_7] : memref<16x1xf32, #tpu.memory_space<vmem>>, vector<16x1xf32>
    %63 = vector.broadcast %62 : vector<16x1xf32> to vector<16x256xf32>
    %64 = arith.addf %61, %63 : vector<16x256xf32>
    %c0_8 = arith.constant 0 : index
    %c0_9 = arith.constant 0 : index
    %65 = vector.load %arg2[%c0_8, %c0_9] : memref<16x256xf32, #tpu.memory_space<vmem>>, vector<16x256xf32>
    %66 = arith.mulf %64, %65 : vector<16x256xf32>
    %c0_10 = arith.constant 0 : index
    %c0_11 = arith.constant 0 : index
    %67 = vector.load %arg3[%c0_10, %c0_11] : memref<16x256xf32, #tpu.memory_space<vmem>>, vector<16x256xf32>
    %68 = arith.addf %66, %67 : vector<16x256xf32>
    %cst_12 = arith.constant dense<0.000000e+00> : vector<256xf32>
    %69 = vector.multi_reduction <add>, %68, %cst_12 [0] : vector<16x256xf32> to vector<256xf32>
    %70 = vector.shape_cast %69 : vector<256xf32> to vector<1x256xf32>
    %71 = arith.mulf %68, %68 : vector<16x256xf32>
    %cst_13 = arith.constant dense<0.000000e+00> : vector<256xf32>
    %72 = vector.multi_reduction <add>, %71, %cst_13 [0] : vector<16x256xf32> to vector<256xf32>
    %73 = vector.shape_cast %72 : vector<256xf32> to vector<1x256xf32>
    %74 = vector.shape_cast %70 : vector<1x256xf32> to vector<1x1x256xf32>
    %cst_14 = arith.constant dense<0.000000e+00> : vector<1x1xf32>
    %75 = vector.multi_reduction <add>, %74, %cst_14 [2] : vector<1x1x256xf32> to vector<1x1xf32>
    %76 = vector.shape_cast %75 : vector<1x1xf32> to vector<1x1x1xf32>
    %77 = vector.shape_cast %73 : vector<1x256xf32> to vector<1x1x256xf32>
    %cst_15 = arith.constant dense<0.000000e+00> : vector<1x1xf32>
    %78 = vector.multi_reduction <add>, %77, %cst_15 [2] : vector<1x1x256xf32> to vector<1x1xf32>
    %79 = vector.shape_cast %78 : vector<1x1xf32> to vector<1x1x1xf32>
    %cst_16 = arith.constant 2.048000e+03 : f32
    %80 = vector.broadcast %cst_16 : f32 to vector<1x1x1xf32>
    %81 = arith.divf %76, %80 : vector<1x1x1xf32>
    %cst_17 = arith.constant 2.048000e+03 : f32
    %82 = vector.broadcast %cst_17 : f32 to vector<1x1x1xf32>
    %83 = arith.divf %79, %82 : vector<1x1x1xf32>
    %84 = arith.mulf %81, %81 : vector<1x1x1xf32>
    %85 = arith.subf %83, %84 : vector<1x1x1xf32>
    %cst_18 = arith.constant 9.99999974E-6 : f32
    %86 = vector.broadcast %cst_18 : f32 to vector<1x1x1xf32>
    %87 = arith.addf %85, %86 : vector<1x1x1xf32>
    %88 = math.rsqrt %87 : vector<1x1x1xf32>
    %89 = vector.shape_cast %81 : vector<1x1x1xf32> to vector<1x1x1xf32>
    %90 = vector.broadcast %89 : vector<1x1x1xf32> to vector<1x1x256xf32>
    %91 = vector.shape_cast %90 : vector<1x1x256xf32> to vector<1x256xf32>
    %92 = vector.shape_cast %88 : vector<1x1x1xf32> to vector<1x1x1xf32>
    %93 = vector.broadcast %92 : vector<1x1x1xf32> to vector<1x1x256xf32>
    %94 = vector.shape_cast %93 : vector<1x1x256xf32> to vector<1x256xf32>
    %95 = vector.broadcast %91 : vector<1x256xf32> to vector<16x256xf32>
    %96 = arith.subf %68, %95 : vector<16x256xf32>
    %97 = vector.broadcast %94 : vector<1x256xf32> to vector<16x256xf32>
    %98 = arith.mulf %96, %97 : vector<16x256xf32>
    %c0_19 = arith.constant 0 : index
    %c0_20 = arith.constant 0 : index
    %99 = vector.load %arg7[%c0_19, %c0_20] : memref<16x1xf32, #tpu.memory_space<vmem>>, vector<16x1xf32>
    %100 = vector.broadcast %99 : vector<16x1xf32> to vector<16x256xf32>
    %101 = arith.mulf %98, %100 : vector<16x256xf32>
    %c0_21 = arith.constant 0 : index
    %c0_22 = arith.constant 0 : index
    %102 = vector.load %arg8[%c0_21, %c0_22] : memref<16x1xf32, #tpu.memory_space<vmem>>, vector<16x1xf32>
    %103 = vector.broadcast %102 : vector<16x1xf32> to vector<16x256xf32>
    %104 = arith.addf %101, %103 : vector<16x256xf32>
    %105 = arith.truncf %104 : vector<16x256xf32> to vector<16x256xbf16>
    %c0_23 = arith.constant 0 : index
    %c0_24 = arith.constant 0 : index
    %106 = vector.load %arg9[%c0_23, %c0_24] : memref<16x144xbf16, #tpu.memory_space<vmem>>, vector<16x144xbf16>
    %107 = vector.extract_strided_slice %105 {offsets = [0, 239], sizes = [16, 17], strides = [1, 1]} : vector<16x256xbf16> to vector<16x17xbf16>
    %108 = vector.extract_strided_slice %105 {offsets = [0, 0], sizes = [16, 239], strides = [1, 1]} : vector<16x256xbf16> to vector<16x239xbf16>
    %109 = tpu.concatenate %107, %108 in 1 : vector<16x17xbf16>, vector<16x239xbf16> -> vector<16x256xbf16>
    %110 = vector.extract_strided_slice %0 {offsets = [0, 0, 0], sizes = [1, 1, 256], strides = [1, 1, 1]} : vector<9x1x256xbf16> to vector<1x1x256xbf16>
    %111 = vector.shape_cast %110 : vector<1x1x256xbf16> to vector<1x256xbf16>
    %112 = vector.broadcast %111 : vector<1x256xbf16> to vector<16x256xbf16>
    %113 = arith.mulf %109, %112 : vector<16x256xbf16>
    %114 = vector.extract_strided_slice %105 {offsets = [0, 240], sizes = [16, 16], strides = [1, 1]} : vector<16x256xbf16> to vector<16x16xbf16>
    %115 = vector.extract_strided_slice %105 {offsets = [0, 0], sizes = [16, 240], strides = [1, 1]} : vector<16x256xbf16> to vector<16x240xbf16>
    %116 = tpu.concatenate %114, %115 in 1 : vector<16x16xbf16>, vector<16x240xbf16> -> vector<16x256xbf16>
    %117 = vector.extract_strided_slice %0 {offsets = [1, 0, 0], sizes = [1, 1, 256], strides = [1, 1, 1]} : vector<9x1x256xbf16> to vector<1x1x256xbf16>
    %118 = vector.shape_cast %117 : vector<1x1x256xbf16> to vector<1x256xbf16>
    %119 = vector.broadcast %118 : vector<1x256xbf16> to vector<16x256xbf16>
    %120 = arith.mulf %116, %119 : vector<16x256xbf16>
    %121 = vector.extract_strided_slice %105 {offsets = [0, 241], sizes = [16, 15], strides = [1, 1]} : vector<16x256xbf16> to vector<16x15xbf16>
    %122 = vector.extract_strided_slice %105 {offsets = [0, 0], sizes = [16, 241], strides = [1, 1]} : vector<16x256xbf16> to vector<16x241xbf16>
    %123 = tpu.concatenate %121, %122 in 1 : vector<16x15xbf16>, vector<16x241xbf16> -> vector<16x256xbf16>
    %124 = vector.extract_strided_slice %0 {offsets = [2, 0, 0], sizes = [1, 1, 256], strides = [1, 1, 1]} : vector<9x1x256xbf16> to vector<1x1x256xbf16>
    %125 = vector.shape_cast %124 : vector<1x1x256xbf16> to vector<1x256xbf16>
    %126 = vector.broadcast %125 : vector<1x256xbf16> to vector<16x256xbf16>
    %127 = arith.mulf %123, %126 : vector<16x256xbf16>
    %128 = vector.extract_strided_slice %105 {offsets = [0, 255], sizes = [16, 1], strides = [1, 1]} : vector<16x256xbf16> to vector<16x1xbf16>
    %129 = vector.extract_strided_slice %105 {offsets = [0, 0], sizes = [16, 255], strides = [1, 1]} : vector<16x256xbf16> to vector<16x255xbf16>
    %130 = tpu.concatenate %128, %129 in 1 : vector<16x1xbf16>, vector<16x255xbf16> -> vector<16x256xbf16>
    %131 = vector.extract_strided_slice %0 {offsets = [3, 0, 0], sizes = [1, 1, 256], strides = [1, 1, 1]} : vector<9x1x256xbf16> to vector<1x1x256xbf16>
    %132 = vector.shape_cast %131 : vector<1x1x256xbf16> to vector<1x256xbf16>
    %133 = vector.broadcast %132 : vector<1x256xbf16> to vector<16x256xbf16>
    %134 = arith.mulf %130, %133 : vector<16x256xbf16>
    %135 = vector.extract_strided_slice %105 {offsets = [0, 1], sizes = [16, 255], strides = [1, 1]} : vector<16x256xbf16> to vector<16x255xbf16>
    %136 = vector.extract_strided_slice %105 {offsets = [0, 0], sizes = [16, 1], strides = [1, 1]} : vector<16x256xbf16> to vector<16x1xbf16>
    %137 = tpu.concatenate %135, %136 in 1 : vector<16x255xbf16>, vector<16x1xbf16> -> vector<16x256xbf16>
    %138 = vector.extract_strided_slice %0 {offsets = [5, 0, 0], sizes = [1, 1, 256], strides = [1, 1, 1]} : vector<9x1x256xbf16> to vector<1x1x256xbf16>
    %139 = vector.shape_cast %138 : vector<1x1x256xbf16> to vector<1x256xbf16>
    %140 = vector.broadcast %139 : vector<1x256xbf16> to vector<16x256xbf16>
    %141 = arith.mulf %137, %140 : vector<16x256xbf16>
    %142 = vector.extract_strided_slice %105 {offsets = [0, 15], sizes = [16, 241], strides = [1, 1]} : vector<16x256xbf16> to vector<16x241xbf16>
    %143 = vector.extract_strided_slice %105 {offsets = [0, 0], sizes = [16, 15], strides = [1, 1]} : vector<16x256xbf16> to vector<16x15xbf16>
    %144 = tpu.concatenate %142, %143 in 1 : vector<16x241xbf16>, vector<16x15xbf16> -> vector<16x256xbf16>
    %145 = vector.extract_strided_slice %0 {offsets = [6, 0, 0], sizes = [1, 1, 256], strides = [1, 1, 1]} : vector<9x1x256xbf16> to vector<1x1x256xbf16>
    %146 = vector.shape_cast %145 : vector<1x1x256xbf16> to vector<1x256xbf16>
    %147 = vector.broadcast %146 : vector<1x256xbf16> to vector<16x256xbf16>
    %148 = arith.mulf %144, %147 : vector<16x256xbf16>
    %149 = vector.extract_strided_slice %105 {offsets = [0, 16], sizes = [16, 240], strides = [1, 1]} : vector<16x256xbf16> to vector<16x240xbf16>
    %150 = vector.extract_strided_slice %105 {offsets = [0, 0], sizes = [16, 16], strides = [1, 1]} : vector<16x256xbf16> to vector<16x16xbf16>
    %151 = tpu.concatenate %149, %150 in 1 : vector<16x240xbf16>, vector<16x16xbf16> -> vector<16x256xbf16>
    %152 = vector.extract_strided_slice %0 {offsets = [7, 0, 0], sizes = [1, 1, 256], strides = [1, 1, 1]} : vector<9x1x256xbf16> to vector<1x1x256xbf16>
    %153 = vector.shape_cast %152 : vector<1x1x256xbf16> to vector<1x256xbf16>
    %154 = vector.broadcast %153 : vector<1x256xbf16> to vector<16x256xbf16>
    %155 = arith.mulf %151, %154 : vector<16x256xbf16>
    %156 = vector.extract_strided_slice %105 {offsets = [0, 17], sizes = [16, 239], strides = [1, 1]} : vector<16x256xbf16> to vector<16x239xbf16>
    %157 = vector.extract_strided_slice %105 {offsets = [0, 0], sizes = [16, 17], strides = [1, 1]} : vector<16x256xbf16> to vector<16x17xbf16>
    %158 = tpu.concatenate %156, %157 in 1 : vector<16x239xbf16>, vector<16x17xbf16> -> vector<16x256xbf16>
    %159 = vector.extract_strided_slice %0 {offsets = [8, 0, 0], sizes = [1, 1, 256], strides = [1, 1, 1]} : vector<9x1x256xbf16> to vector<1x1x256xbf16>
    %160 = vector.shape_cast %159 : vector<1x1x256xbf16> to vector<1x256xbf16>
    %161 = vector.broadcast %160 : vector<1x256xbf16> to vector<16x256xbf16>
    %162 = arith.mulf %158, %161 : vector<16x256xbf16>
    %163 = tpu.concatenate %113, %120, %127, %134, %105, %141, %148, %155, %162 in 0 : vector<16x256xbf16>, vector<16x256xbf16>, vector<16x256xbf16>, vector<16x256xbf16>, vector<16x256xbf16>, vector<16x256xbf16>, vector<16x256xbf16>, vector<16x256xbf16>, vector<16x256xbf16> -> vector<144x256xbf16>
    %cst_25 = arith.constant dense<0.000000e+00> : vector<16x256xf32>
    %164 = tpu.matmul %106, %163, %cst_25 {dimension_numbers = #tpu.dot_dimension_numbers<[1], [0], [0], [1], [0, 0, 1, 1], [], []>} : vector<16x144xbf16>, vector<144x256xbf16>, vector<16x256xf32> -> vector<16x256xf32>
    %c0_26 = arith.constant 0 : index
    %c0_27 = arith.constant 0 : index
    %165 = vector.load %arg10[%c0_26, %c0_27] : memref<16x1xf32, #tpu.memory_space<vmem>>, vector<16x1xf32>
    %166 = vector.broadcast %165 : vector<16x1xf32> to vector<16x256xf32>
    %167 = arith.addf %164, %166 : vector<16x256xf32>
    %cst_28 = arith.constant 5.000000e-01 : f32
    %168 = vector.broadcast %cst_28 : f32 to vector<16x256xf32>
    %169 = arith.mulf %168, %167 : vector<16x256xf32>
    %cst_29 = arith.constant 4.471500e-02 : f32
    %170 = vector.broadcast %cst_29 : f32 to vector<16x256xf32>
    %171 = arith.mulf %170, %167 : vector<16x256xf32>
    %172 = arith.mulf %171, %167 : vector<16x256xf32>
    %173 = arith.mulf %172, %167 : vector<16x256xf32>
    %174 = arith.addf %167, %173 : vector<16x256xf32>
    %cst_30 = arith.constant 0.797884583 : f32
    %175 = vector.broadcast %cst_30 : f32 to vector<16x256xf32>
    %176 = arith.mulf %175, %174 : vector<16x256xf32>
    %177 = math.tanh %176 : vector<16x256xf32>
    %cst_31 = arith.constant 1.000000e+00 : f32
    %178 = vector.broadcast %cst_31 : f32 to vector<16x256xf32>
    %179 = arith.addf %178, %177 : vector<16x256xf32>
    %180 = arith.mulf %169, %179 : vector<16x256xf32>
    %cst_32 = arith.constant dense<0.000000e+00> : vector<256xf32>
    %181 = vector.multi_reduction <add>, %180, %cst_32 [0] : vector<16x256xf32> to vector<256xf32>
    %182 = vector.shape_cast %181 : vector<256xf32> to vector<1x256xf32>
    %183 = arith.mulf %180, %180 : vector<16x256xf32>
    %cst_33 = arith.constant dense<0.000000e+00> : vector<256xf32>
    %184 = vector.multi_reduction <add>, %183, %cst_33 [0] : vector<16x256xf32> to vector<256xf32>
    %185 = vector.shape_cast %184 : vector<256xf32> to vector<1x256xf32>
    %186 = vector.shape_cast %182 : vector<1x256xf32> to vector<1x1x256xf32>
    %cst_34 = arith.constant dense<0.000000e+00> : vector<1x1xf32>
    %187 = vector.multi_reduction <add>, %186, %cst_34 [2] : vector<1x1x256xf32> to vector<1x1xf32>
    %188 = vector.shape_cast %187 : vector<1x1xf32> to vector<1x1x1xf32>
    %189 = vector.shape_cast %185 : vector<1x256xf32> to vector<1x1x256xf32>
    %cst_35 = arith.constant dense<0.000000e+00> : vector<1x1xf32>
    %190 = vector.multi_reduction <add>, %189, %cst_35 [2] : vector<1x1x256xf32> to vector<1x1xf32>
    %191 = vector.shape_cast %190 : vector<1x1xf32> to vector<1x1x1xf32>
    %cst_36 = arith.constant 4.096000e+03 : f32
    %192 = vector.broadcast %cst_36 : f32 to vector<1x1x1xf32>
    %193 = arith.divf %188, %192 : vector<1x1x1xf32>
    %cst_37 = arith.constant 4.096000e+03 : f32
    %194 = vector.broadcast %cst_37 : f32 to vector<1x1x1xf32>
    %195 = arith.divf %191, %194 : vector<1x1x1xf32>
    %196 = arith.mulf %193, %193 : vector<1x1x1xf32>
    %197 = arith.subf %195, %196 : vector<1x1x1xf32>
    %cst_38 = arith.constant 9.99999974E-6 : f32
    %198 = vector.broadcast %cst_38 : f32 to vector<1x1x1xf32>
    %199 = arith.addf %197, %198 : vector<1x1x1xf32>
    %200 = math.rsqrt %199 : vector<1x1x1xf32>
    %201 = vector.shape_cast %193 : vector<1x1x1xf32> to vector<1x1x1xf32>
    %202 = vector.broadcast %201 : vector<1x1x1xf32> to vector<1x1x256xf32>
    %203 = vector.shape_cast %202 : vector<1x1x256xf32> to vector<1x256xf32>
    %204 = vector.shape_cast %200 : vector<1x1x1xf32> to vector<1x1x1xf32>
    %205 = vector.broadcast %204 : vector<1x1x1xf32> to vector<1x1x256xf32>
    %206 = vector.shape_cast %205 : vector<1x1x256xf32> to vector<1x256xf32>
    %207 = vector.broadcast %203 : vector<1x256xf32> to vector<16x256xf32>
    %208 = arith.subf %180, %207 : vector<16x256xf32>
    %209 = vector.broadcast %206 : vector<1x256xf32> to vector<16x256xf32>
    %210 = arith.mulf %208, %209 : vector<16x256xf32>
    %c0_39 = arith.constant 0 : index
    %c0_40 = arith.constant 0 : index
    %211 = vector.load %arg11[%c0_39, %c0_40] : memref<16x1xf32, #tpu.memory_space<vmem>>, vector<16x1xf32>
    %212 = vector.broadcast %211 : vector<16x1xf32> to vector<16x256xf32>
    %213 = arith.mulf %210, %212 : vector<16x256xf32>
    %c0_41 = arith.constant 0 : index
    %c0_42 = arith.constant 0 : index
    %214 = vector.load %arg12[%c0_41, %c0_42] : memref<16x1xf32, #tpu.memory_space<vmem>>, vector<16x1xf32>
    %215 = vector.broadcast %214 : vector<16x1xf32> to vector<16x256xf32>
    %216 = arith.addf %213, %215 : vector<16x256xf32>
    %217 = arith.truncf %216 : vector<16x256xf32> to vector<16x256xbf16>
    %c0_43 = arith.constant 0 : index
    %c0_44 = arith.constant 0 : index
    %218 = vector.load %arg13[%c0_43, %c0_44] : memref<16x144xbf16, #tpu.memory_space<vmem>>, vector<16x144xbf16>
    %219 = vector.extract_strided_slice %217 {offsets = [0, 239], sizes = [16, 17], strides = [1, 1]} : vector<16x256xbf16> to vector<16x17xbf16>
    %220 = vector.extract_strided_slice %217 {offsets = [0, 0], sizes = [16, 239], strides = [1, 1]} : vector<16x256xbf16> to vector<16x239xbf16>
    %221 = tpu.concatenate %219, %220 in 1 : vector<16x17xbf16>, vector<16x239xbf16> -> vector<16x256xbf16>
    %222 = vector.extract_strided_slice %0 {offsets = [0, 0, 0], sizes = [1, 1, 256], strides = [1, 1, 1]} : vector<9x1x256xbf16> to vector<1x1x256xbf16>
    %223 = vector.shape_cast %222 : vector<1x1x256xbf16> to vector<1x256xbf16>
    %224 = vector.broadcast %223 : vector<1x256xbf16> to vector<16x256xbf16>
    %225 = arith.mulf %221, %224 : vector<16x256xbf16>
    %226 = vector.extract_strided_slice %217 {offsets = [0, 240], sizes = [16, 16], strides = [1, 1]} : vector<16x256xbf16> to vector<16x16xbf16>
    %227 = vector.extract_strided_slice %217 {offsets = [0, 0], sizes = [16, 240], strides = [1, 1]} : vector<16x256xbf16> to vector<16x240xbf16>
    %228 = tpu.concatenate %226, %227 in 1 : vector<16x16xbf16>, vector<16x240xbf16> -> vector<16x256xbf16>
    %229 = vector.extract_strided_slice %0 {offsets = [1, 0, 0], sizes = [1, 1, 256], strides = [1, 1, 1]} : vector<9x1x256xbf16> to vector<1x1x256xbf16>
    %230 = vector.shape_cast %229 : vector<1x1x256xbf16> to vector<1x256xbf16>
    %231 = vector.broadcast %230 : vector<1x256xbf16> to vector<16x256xbf16>
    %232 = arith.mulf %228, %231 : vector<16x256xbf16>
    %233 = vector.extract_strided_slice %217 {offsets = [0, 241], sizes = [16, 15], strides = [1, 1]} : vector<16x256xbf16> to vector<16x15xbf16>
    %234 = vector.extract_strided_slice %217 {offsets = [0, 0], sizes = [16, 241], strides = [1, 1]} : vector<16x256xbf16> to vector<16x241xbf16>
    %235 = tpu.concatenate %233, %234 in 1 : vector<16x15xbf16>, vector<16x241xbf16> -> vector<16x256xbf16>
    %236 = vector.extract_strided_slice %0 {offsets = [2, 0, 0], sizes = [1, 1, 256], strides = [1, 1, 1]} : vector<9x1x256xbf16> to vector<1x1x256xbf16>
    %237 = vector.shape_cast %236 : vector<1x1x256xbf16> to vector<1x256xbf16>
    %238 = vector.broadcast %237 : vector<1x256xbf16> to vector<16x256xbf16>
    %239 = arith.mulf %235, %238 : vector<16x256xbf16>
    %240 = vector.extract_strided_slice %217 {offsets = [0, 255], sizes = [16, 1], strides = [1, 1]} : vector<16x256xbf16> to vector<16x1xbf16>
    %241 = vector.extract_strided_slice %217 {offsets = [0, 0], sizes = [16, 255], strides = [1, 1]} : vector<16x256xbf16> to vector<16x255xbf16>
    %242 = tpu.concatenate %240, %241 in 1 : vector<16x1xbf16>, vector<16x255xbf16> -> vector<16x256xbf16>
    %243 = vector.extract_strided_slice %0 {offsets = [3, 0, 0], sizes = [1, 1, 256], strides = [1, 1, 1]} : vector<9x1x256xbf16> to vector<1x1x256xbf16>
    %244 = vector.shape_cast %243 : vector<1x1x256xbf16> to vector<1x256xbf16>
    %245 = vector.broadcast %244 : vector<1x256xbf16> to vector<16x256xbf16>
    %246 = arith.mulf %242, %245 : vector<16x256xbf16>
    %247 = vector.extract_strided_slice %217 {offsets = [0, 1], sizes = [16, 255], strides = [1, 1]} : vector<16x256xbf16> to vector<16x255xbf16>
    %248 = vector.extract_strided_slice %217 {offsets = [0, 0], sizes = [16, 1], strides = [1, 1]} : vector<16x256xbf16> to vector<16x1xbf16>
    %249 = tpu.concatenate %247, %248 in 1 : vector<16x255xbf16>, vector<16x1xbf16> -> vector<16x256xbf16>
    %250 = vector.extract_strided_slice %0 {offsets = [5, 0, 0], sizes = [1, 1, 256], strides = [1, 1, 1]} : vector<9x1x256xbf16> to vector<1x1x256xbf16>
    %251 = vector.shape_cast %250 : vector<1x1x256xbf16> to vector<1x256xbf16>
    %252 = vector.broadcast %251 : vector<1x256xbf16> to vector<16x256xbf16>
    %253 = arith.mulf %249, %252 : vector<16x256xbf16>
    %254 = vector.extract_strided_slice %217 {offsets = [0, 15], sizes = [16, 241], strides = [1, 1]} : vector<16x256xbf16> to vector<16x241xbf16>
    %255 = vector.extract_strided_slice %217 {offsets = [0, 0], sizes = [16, 15], strides = [1, 1]} : vector<16x256xbf16> to vector<16x15xbf16>
    %256 = tpu.concatenate %254, %255 in 1 : vector<16x241xbf16>, vector<16x15xbf16> -> vector<16x256xbf16>
    %257 = vector.extract_strided_slice %0 {offsets = [6, 0, 0], sizes = [1, 1, 256], strides = [1, 1, 1]} : vector<9x1x256xbf16> to vector<1x1x256xbf16>
    %258 = vector.shape_cast %257 : vector<1x1x256xbf16> to vector<1x256xbf16>
    %259 = vector.broadcast %258 : vector<1x256xbf16> to vector<16x256xbf16>
    %260 = arith.mulf %256, %259 : vector<16x256xbf16>
    %261 = vector.extract_strided_slice %217 {offsets = [0, 16], sizes = [16, 240], strides = [1, 1]} : vector<16x256xbf16> to vector<16x240xbf16>
    %262 = vector.extract_strided_slice %217 {offsets = [0, 0], sizes = [16, 16], strides = [1, 1]} : vector<16x256xbf16> to vector<16x16xbf16>
    %263 = tpu.concatenate %261, %262 in 1 : vector<16x240xbf16>, vector<16x16xbf16> -> vector<16x256xbf16>
    %264 = vector.extract_strided_slice %0 {offsets = [7, 0, 0], sizes = [1, 1, 256], strides = [1, 1, 1]} : vector<9x1x256xbf16> to vector<1x1x256xbf16>
    %265 = vector.shape_cast %264 : vector<1x1x256xbf16> to vector<1x256xbf16>
    %266 = vector.broadcast %265 : vector<1x256xbf16> to vector<16x256xbf16>
    %267 = arith.mulf %263, %266 : vector<16x256xbf16>
    %268 = vector.extract_strided_slice %217 {offsets = [0, 17], sizes = [16, 239], strides = [1, 1]} : vector<16x256xbf16> to vector<16x239xbf16>
    %269 = vector.extract_strided_slice %217 {offsets = [0, 0], sizes = [16, 17], strides = [1, 1]} : vector<16x256xbf16> to vector<16x17xbf16>
    %270 = tpu.concatenate %268, %269 in 1 : vector<16x239xbf16>, vector<16x17xbf16> -> vector<16x256xbf16>
    %271 = vector.extract_strided_slice %0 {offsets = [8, 0, 0], sizes = [1, 1, 256], strides = [1, 1, 1]} : vector<9x1x256xbf16> to vector<1x1x256xbf16>
    %272 = vector.shape_cast %271 : vector<1x1x256xbf16> to vector<1x256xbf16>
    %273 = vector.broadcast %272 : vector<1x256xbf16> to vector<16x256xbf16>
    %274 = arith.mulf %270, %273 : vector<16x256xbf16>
    %275 = tpu.concatenate %225, %232, %239, %246, %217, %253, %260, %267, %274 in 0 : vector<16x256xbf16>, vector<16x256xbf16>, vector<16x256xbf16>, vector<16x256xbf16>, vector<16x256xbf16>, vector<16x256xbf16>, vector<16x256xbf16>, vector<16x256xbf16>, vector<16x256xbf16> -> vector<144x256xbf16>
    %cst_45 = arith.constant dense<0.000000e+00> : vector<16x256xf32>
    %276 = tpu.matmul %218, %275, %cst_45 {dimension_numbers = #tpu.dot_dimension_numbers<[1], [0], [0], [1], [0, 0, 1, 1], [], []>} : vector<16x144xbf16>, vector<144x256xbf16>, vector<16x256xf32> -> vector<16x256xf32>
    %c0_46 = arith.constant 0 : index
    %c0_47 = arith.constant 0 : index
    %277 = vector.load %arg14[%c0_46, %c0_47] : memref<16x1xf32, #tpu.memory_space<vmem>>, vector<16x1xf32>
    %278 = vector.broadcast %277 : vector<16x1xf32> to vector<16x256xf32>
    %279 = arith.addf %276, %278 : vector<16x256xf32>
    %c0_48 = arith.constant 0 : index
    %c0_49 = arith.constant 0 : index
    %280 = vector.load %arg15[%c0_48, %c0_49] : memref<16x16xbf16, #tpu.memory_space<vmem>>, vector<16x16xbf16>
    %cst_50 = arith.constant dense<0.000000e+00> : vector<16x256xf32>
    %281 = tpu.matmul %280, %2, %cst_50 {dimension_numbers = #tpu.dot_dimension_numbers<[1], [0], [0], [1], [0, 0, 1, 1], [], []>} : vector<16x16xbf16>, vector<16x256xbf16>, vector<16x256xf32> -> vector<16x256xf32>
    %c0_51 = arith.constant 0 : index
    %c0_52 = arith.constant 0 : index
    %282 = vector.load %arg16[%c0_51, %c0_52] : memref<16x1xf32, #tpu.memory_space<vmem>>, vector<16x1xf32>
    %283 = vector.broadcast %282 : vector<16x1xf32> to vector<16x256xf32>
    %284 = arith.addf %281, %283 : vector<16x256xf32>
    %285 = arith.addf %279, %284 : vector<16x256xf32>
    %c0_53 = arith.constant 0 : index
    %c0_54 = arith.constant 0 : index
    %286 = vector.load %arg17[%c0_53, %c0_54] : memref<16x256xf32, #tpu.memory_space<vmem>>, vector<16x256xf32>
    tpu.vector_store %arg17[%c0_53, %c0_54], %285 {strides = array<i32>} : memref<16x256xf32, #tpu.memory_space<vmem>>, vector<16x256xf32>,
    return
  }
  func.func @transform_0(%arg0: i32) -> (i32, i32) {
    %c0_i32 = arith.constant 0 : i32
    %c0_i32_0 = arith.constant 0 : i32
    return %c0_i32, %arg0 : i32, i32
  }
  func.func @transform_1(%arg0: i32) -> (i32, i32) {
    %c0_i32 = arith.constant 0 : i32
    %c0_i32_0 = arith.constant 0 : i32
    return %c0_i32, %arg0 : i32, i32
  }
  func.func @transform_2(%arg0: i32) -> (i32, i32) {
    %c0_i32 = arith.constant 0 : i32
    %c0_i32_0 = arith.constant 0 : i32
    return %c0_i32, %arg0 : i32, i32
  }
  func.func @transform_3(%arg0: i32) -> (i32, i32, i32) {
    %c0_i32 = arith.constant 0 : i32
    %c0_i32_0 = arith.constant 0 : i32
    %c0_i32_1 = arith.constant 0 : i32
    %c0_i32_2 = arith.constant 0 : i32
    return %c0_i32, %c0_i32_0, %c0_i32_1 : i32, i32, i32
  }
  func.func @transform_4(%arg0: i32) -> (i32, i32) {
    %c0_i32 = arith.constant 0 : i32
    %c0_i32_0 = arith.constant 0 : i32
    %c0_i32_1 = arith.constant 0 : i32
    return %c0_i32, %c0_i32_0 : i32, i32
  }
  func.func @transform_5(%arg0: i32) -> (i32, i32) {
    %c0_i32 = arith.constant 0 : i32
    %c0_i32_0 = arith.constant 0 : i32
    %c0_i32_1 = arith.constant 0 : i32
    return %c0_i32, %c0_i32_0 : i32, i32
  }
  func.func @transform_6(%arg0: i32) -> (i32, i32) {
    %c0_i32 = arith.constant 0 : i32
    %c0_i32_0 = arith.constant 0 : i32
    %c0_i32_1 = arith.constant 0 : i32
    return %c0_i32, %c0_i32_0 : i32, i32
  }
  func.func @transform_7(%arg0: i32) -> (i32, i32) {
    %c0_i32 = arith.constant 0 : i32
    %c0_i32_0 = arith.constant 0 : i32
    %c0_i32_1 = arith.constant 0 : i32
    return %c0_i32, %c0_i32_0 : i32, i32
  }
  func.func @transform_8(%arg0: i32) -> (i32, i32) {
    %c0_i32 = arith.constant 0 : i32
    %c0_i32_0 = arith.constant 0 : i32
    %c0_i32_1 = arith.constant 0 : i32
    return %c0_i32, %c0_i32_0 : i32, i32
  }
  func.func @transform_9(%arg0: i32) -> (i32, i32) {
    %c0_i32 = arith.constant 0 : i32
    %c0_i32_0 = arith.constant 0 : i32
    %c0_i32_1 = arith.constant 0 : i32
    return %c0_i32, %c0_i32_0 : i32, i32
  }
  func.func @transform_10(%arg0: i32) -> (i32, i32) {
    %c0_i32 = arith.constant 0 : i32
    %c0_i32_0 = arith.constant 0 : i32
    %c0_i32_1 = arith.constant 0 : i32
    return %c0_i32, %c0_i32_0 : i32, i32
  }
  func.func @transform_11(%arg0: i32) -> (i32, i32) {
    %c0_i32 = arith.constant 0 : i32
    %c0_i32_0 = arith.constant 0 : i32
    %c0_i32_1 = arith.constant 0 : i32
    return %c0_i32, %c0_i32_0 : i32, i32
  }
  func.func @transform_12(%arg0: i32) -> (i32, i32) {
    %c0_i32 = arith.constant 0 : i32
    %c0_i32_0 = arith.constant 0 : i32
    %c0_i32_1 = arith.constant 0 : i32
    return %c0_i32, %c0_i32_0 : i32, i32
  }
  func.func @transform_13(%arg0: i32) -> (i32, i32) {
    %c0_i32 = arith.constant 0 : i32
    %c0_i32_0 = arith.constant 0 : i32
    %c0_i32_1 = arith.constant 0 : i32
    return %c0_i32, %c0_i32_0 : i32, i32
  }
  func.func @transform_14(%arg0: i32) -> (i32, i32) {
    %c0_i32 = arith.constant 0 : i32
    %c0_i32_0 = arith.constant 0 : i32
    %c0_i32_1 = arith.constant 0 : i32
    return %c0_i32, %c0_i32_0 : i32, i32
  }
  func.func @transform_15(%arg0: i32) -> (i32, i32) {
    %c0_i32 = arith.constant 0 : i32
    %c0_i32_0 = arith.constant 0 : i32
    %c0_i32_1 = arith.constant 0 : i32
    return %c0_i32, %c0_i32_0 : i32, i32
  }
  func.func @transform_16(%arg0: i32) -> (i32, i32) {
    %c0_i32 = arith.constant 0 : i32
    %c0_i32_0 = arith.constant 0 : i32
    return %c0_i32, %arg0 : i32, i32
  }
}

</mosaic_0001>

<llo_original>
// kernel: tpu_custom_call.1
$region0: #{tpu_custom_call.1}
  #allocation0 [shape = 'u32[]', space=smem, size = 0x4, offset = 0x4, fixed_abs, tag = 'smem constant byte address 0x4 - core index']
  #allocation1 [shape = 'u32[144,128]{1,0:T(1,128)}', space=vmem, size = 0x12000, scoped, tag = 'internal scratch']
  %s0 = inlined_call_operand.vmem [shape: f32[16,512], index: 0, kind: input, shape index: {}]
  %s1 = inlined_call_operand.vmem [shape: f32[16,512], index: 1, kind: input, shape index: {}]
  %s2 = inlined_call_operand.hbm [shape: f32[16,512], index: 2, kind: input, shape index: {}]
  %s3 = inlined_call_operand.vmem [shape: bf16[9,1,256], index: 3, kind: input, shape index: {}]
  %s4 = inlined_call_operand.vmem [shape: bf16[16,144], index: 4, kind: input, shape index: {}]
  %s5 = inlined_call_operand.vmem [shape: f32[16,1], index: 5, kind: input, shape index: {}]
  %s6 = inlined_call_operand.vmem [shape: f32[16,1], index: 6, kind: input, shape index: {}]
  %s7 = inlined_call_operand.vmem [shape: f32[16,1], index: 7, kind: input, shape index: {}]
  %s8 = inlined_call_operand.vmem [shape: bf16[16,144], index: 8, kind: input, shape index: {}]
  %s9 = inlined_call_operand.vmem [shape: f32[16,1], index: 9, kind: input, shape index: {}]
  %s10 = inlined_call_operand.vmem [shape: f32[16,1], index: 10, kind: input, shape index: {}]
  %s11 = inlined_call_operand.vmem [shape: f32[16,1], index: 11, kind: input, shape index: {}]
  %s12 = inlined_call_operand.hbm [shape: bf16[16,144], index: 12, kind: input, shape index: {}]
  %s13 = inlined_call_operand.vmem [shape: f32[16,1], index: 13, kind: input, shape index: {}]
  %s14 = inlined_call_operand.vmem [shape: bf16[16,16], index: 14, kind: input, shape index: {}]
  %s15 = inlined_call_operand.vmem [shape: f32[16,1], index: 15, kind: input, shape index: {}]
  %s16 = inlined_call_operand.hbm [shape: f32[16,512], index: 16, kind: output, shape index: {}]
  %s17 = sld [smem:[#allocation0]]
  $region151: #{tpu_custom_call.1} parent=0
    _
  %s19 = ssub.s32 1, %s17
  %s20 = scalar_select 0, %s19, %s17
  $region1: #{tpu_custom_call.1} parent=0
    #allocation2 [shape = 'u8[32768]{0}', space=vmem, size = 0x8000, scoped, tag = 'input window, operand 0']
    #allocation3 [shape = 'u8[32768]{0}', space=vmem, size = 0x8000, scoped, tag = 'input window, operand 1']
    #allocation4 [shape = 'u8[32768]{0}', space=vmem, size = 0x8000, scoped, tag = 'input window, operand 2']
    #allocation5 [shape = 's32[2]{0}', space=sflag, size = 0x8, scoped, tag = 'scoped memory for tpu_custom_call.1']
    #allocation6 [shape = 's32[2]{0}', space=sflag, size = 0x8, scoped, tag = 'scoped memory for tpu_custom_call.1']
    #allocation7 [shape = 'u8[8192]{0}', space=vmem, size = 0x2000, scoped, tag = 'input window, operand 12, single buffered']
    #allocation8 [shape = 's32[1]{0}', space=sflag, size = 0x4, scoped, tag = 'scoped memory for tpu_custom_call.1']
    #allocation9 [shape = 'u8[32768]{0}', space=vmem, size = 0x8000, scoped, tag = 'output window, operand 0']
    %21 = vsyncpa [#allocation5], 0
    %s22 = scalar_lea.sflag [#allocation5], 1
    %23 = vsyncpa %s22, 0
    %24 = vsyncpa [#allocation8], 0
    %25 = vsyncpa [#allocation6], 0
    %s26 = scalar_lea.sflag [#allocation6], 1
    %27 = vsyncpa %s26, 0
    loop: start=0, step=1, limit=4
    $region2: #{tpu_custom_call.1} parent=1 // loop_pre_header
      _
    $region3: #{tpu_custom_call.1} parent=1 // loop_header
      %s29 = sphi 0, %s33
      %p30 = scmp.ge.s32.totalorder %s29, 4
      %s39 = sphi 0, %s41
      %s42 = sphi 0, %s39
      %s43 = sphi 0, %s42
      %s59 = sphi 0, %s43
      %s65 = sphi 0, %s67
      %s68 = sphi 0, %s65
      %s69 = sphi 0, %s68
      %s85 = sphi 0, %s69
      %s91 = sphi 0, %s93
      %s94 = sphi 0, %s91
      %s95 = sphi 0, %s94
      %s111 = sphi 0, %s95
      %s115 = sphi 0, %s115
      %s117 = sphi 0, %s115
      %s118 = sphi 0, %s117
      %s132 = sphi 0, %s118
      %s136 = sphi 0, %s136
      %s138 = sphi 0, %s136
      %s139 = sphi 0, %s138
      %s153 = sphi 0, %s139
      %s157 = sphi 0, %s157
      %s159 = sphi 0, %s157
      %s160 = sphi 0, %s159
      %s174 = sphi 0, %s160
      %s178 = sphi 0, %s178
      %s180 = sphi 0, %s178
      %s181 = sphi 0, %s180
      %s195 = sphi 0, %s181
      %s199 = sphi 0, %s199
      %s201 = sphi 0, %s199
      %s202 = sphi 0, %s201
      %s216 = sphi 0, %s202
      %s220 = sphi 0, %s220
      %s222 = sphi 0, %s220
      %s223 = sphi 0, %s222
      %s237 = sphi 0, %s223
      %s241 = sphi 0, %s241
      %s243 = sphi 0, %s241
      %s244 = sphi 0, %s243
      %s258 = sphi 0, %s244
      %s262 = sphi 0, %s262
      %s264 = sphi 0, %s262
      %s265 = sphi 0, %s264
      %s279 = sphi 0, %s265
      %s283 = sphi 0, %s283
      %s285 = sphi 0, %s283
      %s286 = sphi 0, %s285
      %s300 = sphi 0, %s286
      %s304 = sphi 0, %s304
      %s306 = sphi 0, %s304
      %s307 = sphi 0, %s306
      %s321 = sphi 0, %s307
      %s325 = sphi 0, %s325
      %s327 = sphi 0, %s325
      %s328 = sphi 0, %s327
      %s342 = sphi 0, %s328
      %s346 = sphi 0, %s346
      %s348 = sphi 0, %s346
      %s349 = sphi 0, %s348
      %s363 = sphi 0, %s349
      %s367 = sphi 0, %s367
      %s369 = sphi 0, %s367
      %s370 = sphi 0, %s369
      %s384 = sphi 0, %s370
      %s390 = sphi 0, %s392
      %s393 = sphi 0, %s390
      %s394 = sphi 0, %s393
      %s410 = sphi 0, %s394
    $region4: #{tpu_custom_call.1} parent=1 // loop_header_branch
      %32 = sbr.rel (%p30) target = $region8
    $region5: #{tpu_custom_call.1} parent=1 // loop_body
      %s34 = ssub.s32 %s29, 1
      %s35 = ssub.s32 %s29, 2
      %s36 = sadd.s32 %s29, 1
      %s37 = ssub.s32 %s29, %s36
      %p38 = scmp.eq.s32.totalorder %s37, 0
      %s40 = sadd.s32 %s39, 1
      %s41 = scalar_select %p38, %s39, %s40
      %p44 = pneg %p38
      %p45 = scmp.eq.s32.totalorder %s29, 1
      %p46 = por %p44, %p45
      %p47 = scmp.ne.s32.totalorder %s39, %s42
      %p48 = scmp.eq.s32.totalorder %s29, 0
      %p49 = por %p47, %p48
      %p50 = scmp.ne.s32.totalorder %s39, %s42
      %p51 = scmp.eq.s32.totalorder %s34, 1
      %p52 = por %p50, %p51
      %p53 = scmp.ne.s32.totalorder %s42, %s43
      %p54 = scmp.eq.s32.totalorder %s34, 0
      %p55 = por %p53, %p54
      %p56 = scmp.ne.s32.totalorder %s42, %s43
      %p57 = scmp.eq.s32.totalorder %s35, 1
      %p58 = por %p56, %p57
      %p60 = scmp.ne.s32.totalorder %s43, %s59
      %p61 = scmp.eq.s32.totalorder %s35, 0
      %p62 = por %p60, %p61
      %s63 = ssub.s32 %s29, %s36
      %p64 = scmp.eq.s32.totalorder %s63, 0
      %s66 = sadd.s32 %s65, 1
      %s67 = scalar_select %p64, %s65, %s66
      %p70 = pneg %p64
      %p71 = scmp.eq.s32.totalorder %s29, 1
      %p72 = por %p70, %p71
      %p73 = scmp.ne.s32.totalorder %s65, %s68
      %p74 = scmp.eq.s32.totalorder %s29, 0
      %p75 = por %p73, %p74
      %p76 = scmp.ne.s32.totalorder %s65, %s68
      %p77 = scmp.eq.s32.totalorder %s34, 1
      %p78 = por %p76, %p77
      %p79 = scmp.ne.s32.totalorder %s68, %s69
      %p80 = scmp.eq.s32.totalorder %s34, 0
      %p81 = por %p79, %p80
      %p82 = scmp.ne.s32.totalorder %s68, %s69
      %p83 = scmp.eq.s32.totalorder %s35, 1
      %p84 = por %p82, %p83
      %p86 = scmp.ne.s32.totalorder %s69, %s85
      %p87 = scmp.eq.s32.totalorder %s35, 0
      %p88 = por %p86, %p87
      %s89 = ssub.s32 %s29, %s36
      %p90 = scmp.eq.s32.totalorder %s89, 0
      %s92 = sadd.s32 %s91, 1
      %s93 = scalar_select %p90, %s91, %s92
      %p96 = pneg %p90
      %p97 = scmp.eq.s32.totalorder %s29, 1
      %p98 = por %p96, %p97
      %p99 = scmp.ne.s32.totalorder %s91, %s94
      %p100 = scmp.eq.s32.totalorder %s29, 0
      %p101 = por %p99, %p100
      %p102 = scmp.ne.s32.totalorder %s91, %s94
      %p103 = scmp.eq.s32.totalorder %s34, 1
      %p104 = por %p102, %p103
      %p105 = scmp.ne.s32.totalorder %s94, %s95
      %p106 = scmp.eq.s32.totalorder %s34, 0
      %p107 = por %p105, %p106
      %p108 = scmp.ne.s32.totalorder %s94, %s95
      %p109 = scmp.eq.s32.totalorder %s35, 1
      %p110 = por %p108, %p109
      %p112 = scmp.ne.s32.totalorder %s95, %s111
      %p113 = scmp.eq.s32.totalorder %s35, 0
      %p114 = por %p112, %p113
      %s116 = sadd.s32 %s115, 1
      %p119 = scmp.eq.s32.totalorder %s29, 1
      %p120 = scmp.ne.s32.totalorder %s115, %s117
      %p121 = scmp.eq.s32.totalorder %s29, 0
      %p122 = por %p120, %p121
      %p123 = scmp.ne.s32.totalorder %s115, %s117
      %p124 = scmp.eq.s32.totalorder %s34, 1
      %p125 = por %p123, %p124
      %p126 = scmp.ne.s32.totalorder %s117, %s118
      %p127 = scmp.eq.s32.totalorder %s34, 0
      %p128 = por %p126, %p127
      %p129 = scmp.ne.s32.totalorder %s117, %s118
      %p130 = scmp.eq.s32.totalorder %s35, 1
      %p131 = por %p129, %p130
      %p133 = scmp.ne.s32.totalorder %s118, %s132
      %p134 = scmp.eq.s32.totalorder %s35, 0
      %p135 = por %p133, %p134
      %s137 = sadd.s32 %s136, 1
      %p140 = scmp.eq.s32.totalorder %s29, 1
      %p141 = scmp.ne.s32.totalorder %s136, %s138
      %p142 = scmp.eq.s32.totalorder %s29, 0
      %p143 = por %p141, %p142
      %p144 = scmp.ne.s32.totalorder %s136, %s138
      %p145 = scmp.eq.s32.totalorder %s34, 1
      %p146 = por %p144, %p145
      %p147 = scmp.ne.s32.totalorder %s138, %s139
      %p148 = scmp.eq.s32.totalorder %s34, 0
      %p149 = por %p147, %p148
      %p150 = scmp.ne.s32.totalorder %s138, %s139
      %p151 = scmp.eq.s32.totalorder %s35, 1
      %p152 = por %p150, %p151
      %p154 = scmp.ne.s32.totalorder %s139, %s153
      %p155 = scmp.eq.s32.totalorder %s35, 0
      %p156 = por %p154, %p155
      %s158 = sadd.s32 %s157, 1
      %p161 = scmp.eq.s32.totalorder %s29, 1
      %p162 = scmp.ne.s32.totalorder %s157, %s159
      %p163 = scmp.eq.s32.totalorder %s29, 0
      %p164 = por %p162, %p163
      %p165 = scmp.ne.s32.totalorder %s157, %s159
      %p166 = scmp.eq.s32.totalorder %s34, 1
      %p167 = por %p165, %p166
      %p168 = scmp.ne.s32.totalorder %s159, %s160
      %p169 = scmp.eq.s32.totalorder %s34, 0
      %p170 = por %p168, %p169
      %p171 = scmp.ne.s32.totalorder %s159, %s160
      %p172 = scmp.eq.s32.totalorder %s35, 1
      %p173 = por %p171, %p172
      %p175 = scmp.ne.s32.totalorder %s160, %s174
      %p176 = scmp.eq.s32.totalorder %s35, 0
      %p177 = por %p175, %p176
      %s179 = sadd.s32 %s178, 1
      %p182 = scmp.eq.s32.totalorder %s29, 1
      %p183 = scmp.ne.s32.totalorder %s178, %s180
      %p184 = scmp.eq.s32.totalorder %s29, 0
      %p185 = por %p183, %p184
      %p186 = scmp.ne.s32.totalorder %s178, %s180
      %p187 = scmp.eq.s32.totalorder %s34, 1
      %p188 = por %p186, %p187
      %p189 = scmp.ne.s32.totalorder %s180, %s181
      %p190 = scmp.eq.s32.totalorder %s34, 0
      %p191 = por %p189, %p190
      %p192 = scmp.ne.s32.totalorder %s180, %s181
      %p193 = scmp.eq.s32.totalorder %s35, 1
      %p194 = por %p192, %p193
      %p196 = scmp.ne.s32.totalorder %s181, %s195
      %p197 = scmp.eq.s32.totalorder %s35, 0
      %p198 = por %p196, %p197
      %s200 = sadd.s32 %s199, 1
      %p203 = scmp.eq.s32.totalorder %s29, 1
      %p204 = scmp.ne.s32.totalorder %s199, %s201
      %p205 = scmp.eq.s32.totalorder %s29, 0
      %p206 = por %p204, %p205
      %p207 = scmp.ne.s32.totalorder %s199, %s201
      %p208 = scmp.eq.s32.totalorder %s34, 1
      %p209 = por %p207, %p208
      %p210 = scmp.ne.s32.totalorder %s201, %s202
      %p211 = scmp.eq.s32.totalorder %s34, 0
      %p212 = por %p210, %p211
      %p213 = scmp.ne.s32.totalorder %s201, %s202
      %p214 = scmp.eq.s32.totalorder %s35, 1
      %p215 = por %p213, %p214
      %p217 = scmp.ne.s32.totalorder %s202, %s216
      %p218 = scmp.eq.s32.totalorder %s35, 0
      %p219 = por %p217, %p218
      %s221 = sadd.s32 %s220, 1
      %p224 = scmp.eq.s32.totalorder %s29, 1
      %p225 = scmp.ne.s32.totalorder %s220, %s222
      %p226 = scmp.eq.s32.totalorder %s29, 0
      %p227 = por %p225, %p226
      %p228 = scmp.ne.s32.totalorder %s220, %s222
      %p229 = scmp.eq.s32.totalorder %s34, 1
      %p230 = por %p228, %p229
      %p231 = scmp.ne.s32.totalorder %s222, %s223
      %p232 = scmp.eq.s32.totalorder %s34, 0
      %p233 = por %p231, %p232
      %p234 = scmp.ne.s32.totalorder %s222, %s223
      %p235 = scmp.eq.s32.totalorder %s35, 1
      %p236 = por %p234, %p235
      %p238 = scmp.ne.s32.totalorder %s223, %s237
      %p239 = scmp.eq.s32.totalorder %s35, 0
      %p240 = por %p238, %p239
      %s242 = sadd.s32 %s241, 1
      %p245 = scmp.eq.s32.totalorder %s29, 1
      %p246 = scmp.ne.s32.totalorder %s241, %s243
      %p247 = scmp.eq.s32.totalorder %s29, 0
      %p248 = por %p246, %p247
      %p249 = scmp.ne.s32.totalorder %s241, %s243
      %p250 = scmp.eq.s32.totalorder %s34, 1
      %p251 = por %p249, %p250
      %p252 = scmp.ne.s32.totalorder %s243, %s244
      %p253 = scmp.eq.s32.totalorder %s34, 0
      %p254 = por %p252, %p253
      %p255 = scmp.ne.s32.totalorder %s243, %s244
      %p256 = scmp.eq.s32.totalorder %s35, 1
      %p257 = por %p255, %p256
      %p259 = scmp.ne.s32.totalorder %s244, %s258
      %p260 = scmp.eq.s32.totalorder %s35, 0
      %p261 = por %p259, %p260
      %s263 = sadd.s32 %s262, 1
      %p266 = scmp.eq.s32.totalorder %s29, 1
      %p267 = scmp.ne.s32.totalorder %s262, %s264
      %p268 = scmp.eq.s32.totalorder %s29, 0
      %p269 = por %p267, %p268
      %p270 = scmp.ne.s32.totalorder %s262, %s264
      %p271 = scmp.eq.s32.totalorder %s34, 1
      %p272 = por %p270, %p271
      %p273 = scmp.ne.s32.totalorder %s264, %s265
      %p274 = scmp.eq.s32.totalorder %s34, 0
      %p275 = por %p273, %p274
      %p276 = scmp.ne.s32.totalorder %s264, %s265
      %p277 = scmp.eq.s32.totalorder %s35, 1
      %p278 = por %p276, %p277
      %p280 = scmp.ne.s32.totalorder %s265, %s279
      %p281 = scmp.eq.s32.totalorder %s35, 0
      %p282 = por %p280, %p281
      %s284 = sadd.s32 %s283, 1
      %p287 = scmp.eq.s32.totalorder %s29, 1
      %p288 = scmp.ne.s32.totalorder %s283, %s285
      %p289 = scmp.eq.s32.totalorder %s29, 0
      %p290 = por %p288, %p289
      %p291 = scmp.ne.s32.totalorder %s283, %s285
      %p292 = scmp.eq.s32.totalorder %s34, 1
      %p293 = por %p291, %p292
      %p294 = scmp.ne.s32.totalorder %s285, %s286
      %p295 = scmp.eq.s32.totalorder %s34, 0
      %p296 = por %p294, %p295
      %p297 = scmp.ne.s32.totalorder %s285, %s286
      %p298 = scmp.eq.s32.totalorder %s35, 1
      %p299 = por %p297, %p298
      %p301 = scmp.ne.s32.totalorder %s286, %s300
      %p302 = scmp.eq.s32.totalorder %s35, 0
      %p303 = por %p301, %p302
      %s305 = sadd.s32 %s304, 1
      %p308 = scmp.eq.s32.totalorder %s29, 1
      %p309 = scmp.ne.s32.totalorder %s304, %s306
      %p310 = scmp.eq.s32.totalorder %s29, 0
      %p311 = por %p309, %p310
      %p312 = scmp.ne.s32.totalorder %s304, %s306
      %p313 = scmp.eq.s32.totalorder %s34, 1
      %p314 = por %p312, %p313
      %p315 = scmp.ne.s32.totalorder %s306, %s307
      %p316 = scmp.eq.s32.totalorder %s34, 0
      %p317 = por %p315, %p316
      %p318 = scmp.ne.s32.totalorder %s306, %s307
      %p319 = scmp.eq.s32.totalorder %s35, 1
      %p320 = por %p318, %p319
      %p322 = scmp.ne.s32.totalorder %s307, %s321
      %p323 = scmp.eq.s32.totalorder %s35, 0
      %p324 = por %p322, %p323
      %s326 = sadd.s32 %s325, 1
      %p329 = scmp.eq.s32.totalorder %s29, 1
      %p330 = scmp.ne.s32.totalorder %s325, %s327
      %p331 = scmp.eq.s32.totalorder %s29, 0
      %p332 = por %p330, %p331
      %p333 = scmp.ne.s32.totalorder %s325, %s327
      %p334 = scmp.eq.s32.totalorder %s34, 1
      %p335 = por %p333, %p334
      %p336 = scmp.ne.s32.totalorder %s327, %s328
      %p337 = scmp.eq.s32.totalorder %s34, 0
      %p338 = por %p336, %p337
      %p339 = scmp.ne.s32.totalorder %s327, %s328
      %p340 = scmp.eq.s32.totalorder %s35, 1
      %p341 = por %p339, %p340
      %p343 = scmp.ne.s32.totalorder %s328, %s342
      %p344 = scmp.eq.s32.totalorder %s35, 0
      %p345 = por %p343, %p344
      %s347 = sadd.s32 %s346, 1
      %p350 = scmp.eq.s32.totalorder %s29, 1
      %p351 = scmp.ne.s32.totalorder %s346, %s348
      %p352 = scmp.eq.s32.totalorder %s29, 0
      %p353 = por %p351, %p352
      %p354 = scmp.ne.s32.totalorder %s346, %s348
      %p355 = scmp.eq.s32.totalorder %s34, 1
      %p356 = por %p354, %p355
      %p357 = scmp.ne.s32.totalorder %s348, %s349
      %p358 = scmp.eq.s32.totalorder %s34, 0
      %p359 = por %p357, %p358
      %p360 = scmp.ne.s32.totalorder %s348, %s349
      %p361 = scmp.eq.s32.totalorder %s35, 1
      %p362 = por %p360, %p361
      %p364 = scmp.ne.s32.totalorder %s349, %s363
      %p365 = scmp.eq.s32.totalorder %s35, 0
      %p366 = por %p364, %p365
      %s368 = sadd.s32 %s367, 1
      %p371 = scmp.eq.s32.totalorder %s29, 1
      %p372 = scmp.ne.s32.totalorder %s367, %s369
      %p373 = scmp.eq.s32.totalorder %s29, 0
      %p374 = por %p372, %p373
      %p375 = scmp.ne.s32.totalorder %s367, %s369
      %p376 = scmp.eq.s32.totalorder %s34, 1
      %p377 = por %p375, %p376
      %p378 = scmp.ne.s32.totalorder %s369, %s370
      %p379 = scmp.eq.s32.totalorder %s34, 0
      %p380 = por %p378, %p379
      %p381 = scmp.ne.s32.totalorder %s369, %s370
      %p382 = scmp.eq.s32.totalorder %s35, 1
      %p383 = por %p381, %p382
      %p385 = scmp.ne.s32.totalorder %s370, %s384
      %p386 = scmp.eq.s32.totalorder %s35, 0
      %p387 = por %p385, %p386
      %s388 = ssub.s32 %s29, %s36
      %p389 = scmp.eq.s32.totalorder %s388, 0
      %s391 = sadd.s32 %s390, 1
      %s392 = scalar_select %p389, %s390, %s391
      %p395 = pneg %p389
      %p396 = scmp.eq.s32.totalorder %s29, 1
      %p397 = por %p395, %p396
      %p398 = scmp.ne.s32.totalorder %s390, %s393
      %p399 = scmp.eq.s32.totalorder %s29, 0
      %p400 = por %p398, %p399
      %p401 = scmp.ne.s32.totalorder %s390, %s393
      %p402 = scmp.eq.s32.totalorder %s34, 1
      %p403 = por %p401, %p402
      %p404 = scmp.ne.s32.totalorder %s393, %s394
      %p405 = scmp.eq.s32.totalorder %s34, 0
      %p406 = por %p404, %p405
      %p407 = scmp.ne.s32.totalorder %s393, %s394
      %p408 = scmp.eq.s32.totalorder %s35, 1
      %p409 = por %p407, %p408
      %p411 = scmp.ne.s32.totalorder %s394, %s410
      %p412 = scmp.eq.s32.totalorder %s35, 0
      %p413 = por %p411, %p412
      %p414 = scmp.le.s32.totalorder 1, %s29
      %p415 = scmp.lt.s32.totalorder %s29, 3
      %p416 = pnand %p414, %p415
      %p417 = pneg %p416
      // Predicated region
      $region9: #{tpu_custom_call.1} parent=5 // pred_check
        _
      $region10: #{tpu_custom_call.1} parent=5 // pred_check_branch
        %419 = sbr.rel (%p416) target = $region12
      $region11: #{tpu_custom_call.1} parent=5 // pred_region
        %s420 = ssub.s32 %s29, 1
        // Predicated region
        $region13: #{tpu_custom_call.1} parent=11 // pred_check
          %p421 = pneg %p128
        $region14: #{tpu_custom_call.1} parent=11 // pred_check_branch
          %423 = sbr.rel (%p421) target = $region16
        $region15: #{tpu_custom_call.1} parent=11 // pred_region
          _
        $region16: #{tpu_custom_call.1} parent=11 // pred_fallthru
          _
        // Predicated region
        $region17: #{tpu_custom_call.1} parent=11 // pred_check
          %p424 = pneg %p149
        $region18: #{tpu_custom_call.1} parent=11 // pred_check_branch
          %426 = sbr.rel (%p424) target = $region20
        $region19: #{tpu_custom_call.1} parent=11 // pred_region
          _
        $region20: #{tpu_custom_call.1} parent=11 // pred_fallthru
          _
        // Predicated region
        $region21: #{tpu_custom_call.1} parent=11 // pred_check
          %p427 = pneg %p170
        $region22: #{tpu_custom_call.1} parent=11 // pred_check_branch
          %429 = sbr.rel (%p427) target = $region24
        $region23: #{tpu_custom_call.1} parent=11 // pred_region
          _
        $region24: #{tpu_custom_call.1} parent=11 // pred_fallthru
          _
        // Predicated region
        $region25: #{tpu_custom_call.1} parent=11 // pred_check
          %p430 = pneg %p191
        $region26: #{tpu_custom_call.1} parent=11 // pred_check_branch
          %432 = sbr.rel (%p430) target = $region28
        $region27: #{tpu_custom_call.1} parent=11 // pred_region
          _
        $region28: #{tpu_custom_call.1} parent=11 // pred_fallthru
          _
        // Predicated region
        $region29: #{tpu_custom_call.1} parent=11 // pred_check
          %p433 = pneg %p212
        $region30: #{tpu_custom_call.1} parent=11 // pred_check_branch
          %435 = sbr.rel (%p433) target = $region32
        $region31: #{tpu_custom_call.1} parent=11 // pred_region
          _
        $region32: #{tpu_custom_call.1} parent=11 // pred_fallthru
          _
        // Predicated region
        $region33: #{tpu_custom_call.1} parent=11 // pred_check
          %p436 = pneg %p233
        $region34: #{tpu_custom_call.1} parent=11 // pred_check_branch
          %438 = sbr.rel (%p436) target = $region36
        $region35: #{tpu_custom_call.1} parent=11 // pred_region
          _
        $region36: #{tpu_custom_call.1} parent=11 // pred_fallthru
          _
        // Predicated region
        $region37: #{tpu_custom_call.1} parent=11 // pred_check
          %p439 = pneg %p254
        $region38: #{tpu_custom_call.1} parent=11 // pred_check_branch
          %441 = sbr.rel (%p439) target = $region40
        $region39: #{tpu_custom_call.1} parent=11 // pred_region
          _
        $region40: #{tpu_custom_call.1} parent=11 // pred_fallthru
          _
        // Predicated region
        $region41: #{tpu_custom_call.1} parent=11 // pred_check
          %p442 = pneg %p275
        $region42: #{tpu_custom_call.1} parent=11 // pred_check_branch
          %444 = sbr.rel (%p442) target = $region44
        $region43: #{tpu_custom_call.1} parent=11 // pred_region
          _
        $region44: #{tpu_custom_call.1} parent=11 // pred_fallthru
          _
        // Predicated region
        $region45: #{tpu_custom_call.1} parent=11 // pred_check
          %p445 = pneg %p296
        $region46: #{tpu_custom_call.1} parent=11 // pred_check_branch
          %447 = sbr.rel (%p445) target = $region48
        $region47: #{tpu_custom_call.1} parent=11 // pred_region
          _
        $region48: #{tpu_custom_call.1} parent=11 // pred_fallthru
          _
        // Predicated region
        $region49: #{tpu_custom_call.1} parent=11 // pred_check
          %p448 = pneg %p317
        $region50: #{tpu_custom_call.1} parent=11 // pred_check_branch
          %450 = sbr.rel (%p448) target = $region52
        $region51: #{tpu_custom_call.1} parent=11 // pred_region
          %s452 = ssub.s32 256, 256
          %453 = vsyncadd [#allocation8], %s452
          %s454 = sshll.u32 [#allocation7], 4
          %s455 = int_to_ptr.vmem [resolvable:$true] %s454
          %460 = dma.hbm_to_vmem [thread:$0]  %s12, 256, %s455, [#allocation8], 128, 128, 8
        $region52: #{tpu_custom_call.1} parent=11 // pred_fallthru
          _
        // Predicated region
        $region53: #{tpu_custom_call.1} parent=11 // pred_check
          %p461 = pneg %p338
        $region54: #{tpu_custom_call.1} parent=11 // pred_check_branch
          %463 = sbr.rel (%p461) target = $region56
        $region55: #{tpu_custom_call.1} parent=11 // pred_region
          _
        $region56: #{tpu_custom_call.1} parent=11 // pred_fallthru
          _
        // Predicated region
        $region57: #{tpu_custom_call.1} parent=11 // pred_check
          %p464 = pneg %p359
        $region58: #{tpu_custom_call.1} parent=11 // pred_check_branch
          %466 = sbr.rel (%p464) target = $region60
        $region59: #{tpu_custom_call.1} parent=11 // pred_region
          _
        $region60: #{tpu_custom_call.1} parent=11 // pred_fallthru
          _
        // Predicated region
        $region61: #{tpu_custom_call.1} parent=11 // pred_check
          %p467 = pneg %p380
        $region62: #{tpu_custom_call.1} parent=11 // pred_check_branch
          %469 = sbr.rel (%p467) target = $region64
        $region63: #{tpu_custom_call.1} parent=11 // pred_region
          _
        $region64: #{tpu_custom_call.1} parent=11 // pred_fallthru
          _
      $region12: #{tpu_custom_call.1} parent=5 // pred_fallthru
        _
      %p470 = scmp.lt.s32.totalorder %s29, 2
      // Predicated region
      $region65: #{tpu_custom_call.1} parent=5 // pred_check
        %p471 = pneg %p470
      $region66: #{tpu_custom_call.1} parent=5 // pred_check_branch
        %473 = sbr.rel (%p471) target = $region68
      $region67: #{tpu_custom_call.1} parent=5 // pred_region
        // Predicated region
        $region69: #{tpu_custom_call.1} parent=67 // pred_check
          %p474 = pneg %p49
        $region70: #{tpu_custom_call.1} parent=67 // pred_check_branch
          %476 = sbr.rel (%p474) target = $region72
        $region71: #{tpu_custom_call.1} parent=67 // pred_region
          %s477 = sand.u32 %s39, 1
          %s478 = sand.u32 %s39, 1
          %s479 = smul.addr %s478, 32
          %s480 = scalar_lea.vmem [#allocation2], %s479
          %s481 = smul.u32 2, %s29
          %s482 = smul.addr %s481, 8
          %s483 = scalar_lea.vmem %s0, %s482
          // Predicated region
          $region73: #{tpu_custom_call.1} parent=71 // pred_check
            _
          $region74: #{tpu_custom_call.1} parent=71 // pred_check_branch
            %485 = sbr.rel (0) target = $region76
          $region75: #{tpu_custom_call.1} parent=71 // pred_region
            // Predicated region
            $region77: #{tpu_custom_call.1} parent=75 // pred_check
              _
            $region78: #{tpu_custom_call.1} parent=75 // pred_check_branch
              %487 = sbr.rel (0) target = $region80
            $region79: #{tpu_custom_call.1} parent=75 // pred_region
              loop: start=0, step=1, limit=1
              $region81: #{tpu_custom_call.1} parent=79 // loop_pre_header
                _
              $region82: #{tpu_custom_call.1} parent=79 // loop_header
                %s489 = sphi 0, %s493
                %p490 = scmp.ge.s32.totalorder %s489, 1
                %s494 = sphi %s483, %s483
                %s495 = sphi %s480, %s480
              $region83: #{tpu_custom_call.1} parent=79 // loop_header_branch
                %492 = sbr.rel (%p490) target = $region87
              $region84: #{tpu_custom_call.1} parent=79 // loop_body
                %v496 = vld [vmem:[%s494] sm:$0xff]
                %497 = vst [vmem:[%s495] sm:$0xff] %v496
                %v498 = vld [vmem:[%s494 + $0x8] sm:$0xff]
                %499 = vst [vmem:[%s495 + $0x8] sm:$0xff] %v498
                %v500 = vld [vmem:[%s494 + $0x20] sm:$0xff]
                %501 = vst [vmem:[%s495 + $0x10] sm:$0xff] %v500
                %v502 = vld [vmem:[%s494 + $0x28] sm:$0xff]
                %503 = vst [vmem:[%s495 + $0x18] sm:$0xff] %v502
              $region85: #{tpu_custom_call.1} parent=79 // loop_footer
                %s493 = sadd.s32 1, %s489
              $region86: #{tpu_custom_call.1} parent=79 // loop_footer_branch
                %488 = sbr.rel target = $region82
              $region87: #{tpu_custom_call.1} parent=79 // loop_exit
                _
            $region80: #{tpu_custom_call.1} parent=75 // pred_fallthru
              _
            // Predicated region
            $region88: #{tpu_custom_call.1} parent=75 // pred_check
              _
            $region89: #{tpu_custom_call.1} parent=75 // pred_check_branch
              %505 = sbr.rel target = $region91
            $region90: #{tpu_custom_call.1} parent=75 // pred_region
              _
            $region91: #{tpu_custom_call.1} parent=75 // pred_fallthru
              _
          $region76: #{tpu_custom_call.1} parent=71 // pred_fallthru
            _
          %506 = vnop
        $region72: #{tpu_custom_call.1} parent=67 // pred_fallthru
          _
        // Predicated region
        $region92: #{tpu_custom_call.1} parent=67 // pred_check
          %p507 = pneg %p75
        $region93: #{tpu_custom_call.1} parent=67 // pred_check_branch
          %509 = sbr.rel (%p507) target = $region95
        $region94: #{tpu_custom_call.1} parent=67 // pred_region
          %s510 = sand.u32 %s65, 1
          %s511 = sand.u32 %s65, 1
          %s512 = smul.addr %s511, 32
          %s513 = scalar_lea.vmem [#allocation3], %s512
          %s514 = smul.u32 2, %s29
          %s515 = smul.addr %s514, 8
          %s516 = scalar_lea.vmem %s1, %s515
          // Predicated region
          $region96: #{tpu_custom_call.1} parent=94 // pred_check
            _
          $region97: #{tpu_custom_call.1} parent=94 // pred_check_branch
            %518 = sbr.rel (0) target = $region99
          $region98: #{tpu_custom_call.1} parent=94 // pred_region
            // Predicated region
            $region100: #{tpu_custom_call.1} parent=98 // pred_check
              _
            $region101: #{tpu_custom_call.1} parent=98 // pred_check_branch
              %520 = sbr.rel (0) target = $region103
            $region102: #{tpu_custom_call.1} parent=98 // pred_region
              loop: start=0, step=1, limit=1
              $region104: #{tpu_custom_call.1} parent=102 // loop_pre_header
                _
              $region105: #{tpu_custom_call.1} parent=102 // loop_header
                %s522 = sphi 0, %s526
                %p523 = scmp.ge.s32.totalorder %s522, 1
                %s527 = sphi %s516, %s516
                %s528 = sphi %s513, %s513
              $region106: #{tpu_custom_call.1} parent=102 // loop_header_branch
                %525 = sbr.rel (%p523) target = $region110
              $region107: #{tpu_custom_call.1} parent=102 // loop_body
                %v529 = vld [vmem:[%s527] sm:$0xff]
                %530 = vst [vmem:[%s528] sm:$0xff] %v529
                %v531 = vld [vmem:[%s527 + $0x8] sm:$0xff]
                %532 = vst [vmem:[%s528 + $0x8] sm:$0xff] %v531
                %v533 = vld [vmem:[%s527 + $0x20] sm:$0xff]
                %534 = vst [vmem:[%s528 + $0x10] sm:$0xff] %v533
                %v535 = vld [vmem:[%s527 + $0x28] sm:$0xff]
                %536 = vst [vmem:[%s528 + $0x18] sm:$0xff] %v535
              $region108: #{tpu_custom_call.1} parent=102 // loop_footer
                %s526 = sadd.s32 1, %s522
              $region109: #{tpu_custom_call.1} parent=102 // loop_footer_branch
                %521 = sbr.rel target = $region105
              $region110: #{tpu_custom_call.1} parent=102 // loop_exit
                _
            $region103: #{tpu_custom_call.1} parent=98 // pred_fallthru
              _
            // Predicated region
            $region111: #{tpu_custom_call.1} parent=98 // pred_check
              _
            $region112: #{tpu_custom_call.1} parent=98 // pred_check_branch
              %538 = sbr.rel target = $region114
            $region113: #{tpu_custom_call.1} parent=98 // pred_region
              _
            $region114: #{tpu_custom_call.1} parent=98 // pred_fallthru
              _
          $region99: #{tpu_custom_call.1} parent=94 // pred_fallthru
            _
          %539 = vnop
        $region95: #{tpu_custom_call.1} parent=67 // pred_fallthru
          _
        // Predicated region
        $region115: #{tpu_custom_call.1} parent=67 // pred_check
          %p540 = pneg %p101
        $region116: #{tpu_custom_call.1} parent=67 // pred_check_branch
          %542 = sbr.rel (%p540) target = $region118
        $region117: #{tpu_custom_call.1} parent=67 // pred_region
          %s543 = sand.u32 %s91, 1
          %s544 = scalar_lea.sflag [#allocation5], %s543
          %s545 = sand.u32 %s91, 1
          %s546 = smul.addr %s545, 32
          %s547 = scalar_lea.vmem [#allocation4], %s546
          %s548 = smul.u32 2, %s29
          %s550 = ssub.s32 512, 512
          %551 = vsyncadd %s544, %s550
          %s552 = smul.addr %s548, 128
          %s553 = scalar_lea.hbm %s2, %s552
          %s554 = sshll.u32 %s547, 4
          %s555 = int_to_ptr.vmem [resolvable:$true] %s554
          %560 = dma.hbm_to_vmem [thread:$0]  %s553, 512, %s555, %s544, 512, 256, 16
        $region118: #{tpu_custom_call.1} parent=67 // pred_fallthru
          _
      $region68: #{tpu_custom_call.1} parent=5 // pred_fallthru
        _
      %p561 = scmp.le.s32.totalorder 1, %s29
      %p562 = scmp.lt.s32.totalorder %s29, 3
      %p563 = pnand %p561, %p562
      %p564 = pneg %p563
      // Predicated region
      $region119: #{tpu_custom_call.1} parent=5 // pred_check
        _
      $region120: #{tpu_custom_call.1} parent=5 // pred_check_branch
        %566 = sbr.rel (%p563) target = $region122
      $region121: #{tpu_custom_call.1} parent=5 // pred_region
        %s567 = ssub.s32 %s29, 1
        %s568 = sand.u32 %s42, 1
        %s569 = sand.u32 %s42, 1
        %s570 = smul.addr %s569, 32
        %s571 = scalar_lea.vmem [#allocation2], %s570
        // Predicated region
        $region123: #{tpu_custom_call.1} parent=121 // pred_check
          %p572 = pneg %p55
        $region124: #{tpu_custom_call.1} parent=121 // pred_check_branch
          %574 = sbr.rel (%p572) target = $region126
        $region125: #{tpu_custom_call.1} parent=121 // pred_region
          _
        $region126: #{tpu_custom_call.1} parent=121 // pred_fallthru
          _
        %s575 = sand.u32 %s68, 1
        %s576 = sand.u32 %s68, 1
        %s577 = smul.addr %s576, 32
        %s578 = scalar_lea.vmem [#allocation3], %s577
        // Predicated region
        $region127: #{tpu_custom_call.1} parent=121 // pred_check
          %p579 = pneg %p81
        $region128: #{tpu_custom_call.1} parent=121 // pred_check_branch
          %581 = sbr.rel (%p579) target = $region130
        $region129: #{tpu_custom_call.1} parent=121 // pred_region
          _
        $region130: #{tpu_custom_call.1} parent=121 // pred_fallthru
          _
        %s582 = sand.u32 %s94, 1
        %s583 = scalar_lea.sflag [#allocation5], %s582
        %s584 = sand.u32 %s94, 1
        %s585 = smul.addr %s584, 32
        %s586 = scalar_lea.vmem [#allocation4], %s585
        // Predicated region
        $region131: #{tpu_custom_call.1} parent=121 // pred_check
          %p587 = pneg %p107
        $region132: #{tpu_custom_call.1} parent=121 // pred_check_branch
          %589 = sbr.rel (%p587) target = $region134
        $region133: #{tpu_custom_call.1} parent=121 // pred_region
          %590 = dma.done %s583, 512
        $region134: #{tpu_custom_call.1} parent=121 // pred_fallthru
          _
        // Predicated region
        $region135: #{tpu_custom_call.1} parent=121 // pred_check
          %p591 = pneg %p317
        $region136: #{tpu_custom_call.1} parent=121 // pred_check_branch
          %593 = sbr.rel (%p591) target = $region138
        $region137: #{tpu_custom_call.1} parent=121 // pred_region
          %594 = dma.done [#allocation8], 256
        $region138: #{tpu_custom_call.1} parent=121 // pred_fallthru
          _
        %s595 = sand.u32 %s42, 1
        %s596 = sand.u32 %s42, 1
        %s597 = smul.addr %s596, 32
        %s598 = scalar_lea.vmem [#allocation2], %s597
        %p599 = pneg %p55
        %p600 = pneg %p52
        %s601 = sand.u32 %s68, 1
        %s602 = sand.u32 %s68, 1
        %s603 = smul.addr %s602, 32
        %s604 = scalar_lea.vmem [#allocation3], %s603
        %p605 = pneg %p81
        %p606 = pneg %p78
        %s607 = sand.u32 %s94, 1
        %s608 = scalar_lea.sflag [#allocation5], %s607
        %s609 = sand.u32 %s94, 1
        %s610 = smul.addr %s609, 32
        %s611 = scalar_lea.vmem [#allocation4], %s610
        %p612 = pneg %p107
        %p613 = pneg %p104
        %p614 = pneg %p128
        %p615 = pneg %p125
        %p616 = pneg %p149
        %p617 = pneg %p146
        %p618 = pneg %p170
        %p619 = pneg %p167
        %p620 = pneg %p191
        %p621 = pneg %p188
        %p622 = pneg %p212
        %p623 = pneg %p209
        %p624 = pneg %p233
        %p625 = pneg %p230
        %p626 = pneg %p254
        %p627 = pneg %p251
        %p628 = pneg %p275
        %p629 = pneg %p272
        %p630 = pneg %p296
        %p631 = pneg %p293
        %p632 = pneg %p317
        %p633 = pneg %p314
        %p634 = pneg %p338
        %p635 = pneg %p335
        %p636 = pneg %p359
        %p637 = pneg %p356
        %p638 = pneg %p380
        %p639 = pneg %p377
        %p640 = pneg %p406
        %p641 = pneg %p403
        %s642 = sand.u32 %s393, 1
        %s643 = scalar_lea.sflag [#allocation6], %s642
        %s644 = sand.u32 %s393, 1
        %s645 = smul.addr %s644, 32
        %s646 = scalar_lea.vmem [#allocation9], %s645
        %s647 = smul.u32 2, %s34
        %s648 = smul.u32 2, %s34
        %s649 = smul.u32 2, %s34
        %s650 = smul.u32 2, %s34
        %v652 = vld [vmem:[%s3] sm:$0x3]
        %v653 = vld [vmem:[%s3 + $0x2] sm:$0x3]
        %v654 = vld [vmem:[%s3 + $0x4] sm:$0x3]
        %v655 = vld [vmem:[%s3 + $0x6] sm:$0x3]
        %v656 = vld [vmem:[%s3 + $0xa] sm:$0x3]
        %v657 = vld [vmem:[%s3 + $0xc] sm:$0x3]
        %v658 = vld [vmem:[%s3 + $0xe] sm:$0x3]
        %v659 = vld [vmem:[%s3 + $0x10] sm:$0x3]
        %v660 = vld [vmem:[%s571] sm:$0xff]
        %v661 = vld [vmem:[%s571 + $0x8] sm:$0xff]
        %v662 = vld [vmem:[%s571 + $0x10] sm:$0xff]
        %v663 = vld [vmem:[%s571 + $0x18] sm:$0xff]
        %v664 = vpack.c.bf16 %v662, %v660
        %v665 = vpack.c.bf16 %v663, %v661
        %v666 = vld [vmem:[%s4] sm:$0xff]
        %v667 = vld [vmem:[%s4 + $0x8] sm:$0xff]
        %669 = vrot.lane.b32.xlu0 %v665, 17
        %v670 = vpop.permute.xlu0 %669
        %672 = vrot.lane.b32.xlu0 %v664, 17
        %v673 = vpop.permute.xlu0 %672
        %vm674 = vcmask 138240
        %v675 = vsel %vm674, %v673, %v670
        %vm677 = vcmask 138240
        %v680 = vsel %vm677, %v670, %v673
        %v684 = vunpack.c.l.s4 1966171168
        %v685 = vunpack.c.0.s8 %v684
        %v686 = vlaneseq
        %v687 = vshrl.u32 %v686, 7
        %v688 = vsub.s32 %v685, %v687
        %v689 = vrot.slane %v652, %v688
        %v690 = vcombine.high %v689, %v689
        %v692 = vunpack.c.l.s4 1966171168
        %v693 = vunpack.c.0.s8 %v692
        %v694 = vlaneseq
        %v695 = vshrl.u32 %v694, 7
        %v696 = vsub.s32 %v693, %v695
        %v697 = vrot.slane %v689, %v696
        %v699 = vunpack.c.l.s4 1966171168
        %v700 = vunpack.c.0.s8 %v699
        %v701 = vlaneseq
        %v702 = vshrl.u32 %v701, 7
        %v703 = vsub.s32 %v700, %v702
        %v704 = vrot.slane %v690, %v703
        %v706 = vpack.i.b16 %v697, %v697
        %v708 = vlaneseq
        %v709 = vshrl.u32 %v708, 7
        %v710 = vsub.s32 0, %v709
        %v711 = vrot.slane %v706, %v710
        %v713 = vpack.i.b16 %v704, %v704
        %v715 = vlaneseq
        %v716 = vshrl.u32 %v715, 7
        %v717 = vsub.s32 0, %v716
        %v718 = vrot.slane %v713, %v717
        %v719 = vmul.bf16 %v680, %v711
        %v720 = vmul.bf16 %v675, %v718
        %721 = vrot.lane.b32.xlu0 %v665, 16
        %v722 = vpop.permute.xlu0 %721
        %723 = vrot.lane.b32.xlu0 %v664, 16
        %v724 = vpop.permute.xlu0 %723
        %vm725 = vcmask 130048
        %v726 = vsel %vm725, %v724, %v722
        %vm728 = vcmask 130048
        %v731 = vsel %vm728, %v722, %v724
        %v735 = vunpack.c.l.s4 1966171168
        %v736 = vunpack.c.0.s8 %v735
        %v737 = vlaneseq
        %v738 = vshrl.u32 %v737, 7
        %v739 = vsub.s32 %v736, %v738
        %v740 = vrot.slane %v653, %v739
        %v741 = vcombine.high %v740, %v740
        %v743 = vunpack.c.l.s4 1966171168
        %v744 = vunpack.c.0.s8 %v743
        %v745 = vlaneseq
        %v746 = vshrl.u32 %v745, 7
        %v747 = vsub.s32 %v744, %v746
        %v748 = vrot.slane %v740, %v747
        %v750 = vunpack.c.l.s4 1966171168
        %v751 = vunpack.c.0.s8 %v750
        %v752 = vlaneseq
        %v753 = vshrl.u32 %v752, 7
        %v754 = vsub.s32 %v751, %v753
        %v755 = vrot.slane %v741, %v754
        %v757 = vpack.i.b16 %v748, %v748
        %v759 = vlaneseq
        %v760 = vshrl.u32 %v759, 7
        %v761 = vsub.s32 0, %v760
        %v762 = vrot.slane %v757, %v761
        %v764 = vpack.i.b16 %v755, %v755
        %v766 = vlaneseq
        %v767 = vshrl.u32 %v766, 7
        %v768 = vsub.s32 0, %v767
        %v769 = vrot.slane %v764, %v768
        %v770 = vmul.bf16 %v731, %v762
        %v771 = vmul.bf16 %v726, %v769
        %772 = vrot.lane.b32.xlu0 %v665, 15
        %v773 = vpop.permute.xlu0 %772
        %774 = vrot.lane.b32.xlu0 %v664, 15
        %v775 = vpop.permute.xlu0 %774
        %vm776 = vcmask 121856
        %v777 = vsel %vm776, %v775, %v773
        %vm779 = vcmask 121856
        %v782 = vsel %vm779, %v773, %v775
        %v786 = vunpack.c.l.s4 1966171168
        %v787 = vunpack.c.0.s8 %v786
        %v788 = vlaneseq
        %v789 = vshrl.u32 %v788, 7
        %v790 = vsub.s32 %v787, %v789
        %v791 = vrot.slane %v654, %v790
        %v792 = vcombine.high %v791, %v791
        %v794 = vunpack.c.l.s4 1966171168
        %v795 = vunpack.c.0.s8 %v794
        %v796 = vlaneseq
        %v797 = vshrl.u32 %v796, 7
        %v798 = vsub.s32 %v795, %v797
        %v799 = vrot.slane %v791, %v798
        %v801 = vunpack.c.l.s4 1966171168
        %v802 = vunpack.c.0.s8 %v801
        %v803 = vlaneseq
        %v804 = vshrl.u32 %v803, 7
        %v805 = vsub.s32 %v802, %v804
        %v806 = vrot.slane %v792, %v805
        %v808 = vpack.i.b16 %v799, %v799
        %v810 = vlaneseq
        %v811 = vshrl.u32 %v810, 7
        %v812 = vsub.s32 0, %v811
        %v813 = vrot.slane %v808, %v812
        %v815 = vpack.i.b16 %v806, %v806
        %v817 = vlaneseq
        %v818 = vshrl.u32 %v817, 7
        %v819 = vsub.s32 0, %v818
        %v820 = vrot.slane %v815, %v819
        %v821 = vmul.bf16 %v782, %v813
        %v822 = vmul.bf16 %v777, %v820
        %823 = vrot.lane.b32.xlu0 %v665, 1
        %v824 = vpop.permute.xlu0 %823
        %825 = vrot.lane.b32.xlu0 %v664, 1
        %v826 = vpop.permute.xlu0 %825
        %vm827 = vcmask 7168
        %v828 = vsel %vm827, %v826, %v824
        %vm830 = vcmask 7168
        %v833 = vsel %vm830, %v824, %v826
        %v837 = vunpack.c.l.s4 1966171168
        %v838 = vunpack.c.0.s8 %v837
        %v839 = vlaneseq
        %v840 = vshrl.u32 %v839, 7
        %v841 = vsub.s32 %v838, %v840
        %v842 = vrot.slane %v655, %v841
        %v843 = vcombine.high %v842, %v842
        %v845 = vunpack.c.l.s4 1966171168
        %v846 = vunpack.c.0.s8 %v845
        %v847 = vlaneseq
        %v848 = vshrl.u32 %v847, 7
        %v849 = vsub.s32 %v846, %v848
        %v850 = vrot.slane %v842, %v849
        %v852 = vunpack.c.l.s4 1966171168
        %v853 = vunpack.c.0.s8 %v852
        %v854 = vlaneseq
        %v855 = vshrl.u32 %v854, 7
        %v856 = vsub.s32 %v853, %v855
        %v857 = vrot.slane %v843, %v856
        %v859 = vpack.i.b16 %v850, %v850
        %v861 = vlaneseq
        %v862 = vshrl.u32 %v861, 7
        %v863 = vsub.s32 0, %v862
        %v864 = vrot.slane %v859, %v863
        %v866 = vpack.i.b16 %v857, %v857
        %v868 = vlaneseq
        %v869 = vshrl.u32 %v868, 7
        %v870 = vsub.s32 0, %v869
        %v871 = vrot.slane %v866, %v870
        %v872 = vmul.bf16 %v833, %v864
        %v873 = vmul.bf16 %v828, %v871
        %874 = vrot.lane.b32.xlu0 %v664, 127
        %v875 = vpop.permute.xlu0 %874
        %876 = vrot.lane.b32.xlu0 %v665, 127
        %v877 = vpop.permute.xlu0 %876
        %vm878 = vcmask 1039360
        %v879 = vsel %vm878, %v875, %v877
        %vm881 = vcmask 1039360
        %v884 = vsel %vm881, %v877, %v875
        %v888 = vunpack.c.l.s4 1966171168
        %v889 = vunpack.c.0.s8 %v888
        %v890 = vlaneseq
        %v891 = vshrl.u32 %v890, 7
        %v892 = vsub.s32 %v889, %v891
        %v893 = vrot.slane %v656, %v892
        %v894 = vcombine.high %v893, %v893
        %v896 = vunpack.c.l.s4 1966171168
        %v897 = vunpack.c.0.s8 %v896
        %v898 = vlaneseq
        %v899 = vshrl.u32 %v898, 7
        %v900 = vsub.s32 %v897, %v899
        %v901 = vrot.slane %v893, %v900
        %v903 = vunpack.c.l.s4 1966171168
        %v904 = vunpack.c.0.s8 %v903
        %v905 = vlaneseq
        %v906 = vshrl.u32 %v905, 7
        %v907 = vsub.s32 %v904, %v906
        %v908 = vrot.slane %v894, %v907
        %v910 = vpack.i.b16 %v901, %v901
        %v912 = vlaneseq
        %v913 = vshrl.u32 %v912, 7
        %v914 = vsub.s32 0, %v913
        %v915 = vrot.slane %v910, %v914
        %v917 = vpack.i.b16 %v908, %v908
        %v919 = vlaneseq
        %v920 = vshrl.u32 %v919, 7
        %v921 = vsub.s32 0, %v920
        %v922 = vrot.slane %v917, %v921
        %v923 = vmul.bf16 %v879, %v915
        %v924 = vmul.bf16 %v884, %v922
        %925 = vrot.lane.b32.xlu0 %v664, 113
        %v926 = vpop.permute.xlu0 %925
        %927 = vrot.lane.b32.xlu0 %v665, 113
        %v928 = vpop.permute.xlu0 %927
        %vm929 = vcmask 924672
        %v930 = vsel %vm929, %v926, %v928
        %vm932 = vcmask 924672
        %v935 = vsel %vm932, %v928, %v926
        %v939 = vunpack.c.l.s4 1966171168
        %v940 = vunpack.c.0.s8 %v939
        %v941 = vlaneseq
        %v942 = vshrl.u32 %v941, 7
        %v943 = vsub.s32 %v940, %v942
        %v944 = vrot.slane %v657, %v943
        %v945 = vcombine.high %v944, %v944
        %v947 = vunpack.c.l.s4 1966171168
        %v948 = vunpack.c.0.s8 %v947
        %v949 = vlaneseq
        %v950 = vshrl.u32 %v949, 7
        %v951 = vsub.s32 %v948, %v950
        %v952 = vrot.slane %v944, %v951
        %v954 = vunpack.c.l.s4 1966171168
        %v955 = vunpack.c.0.s8 %v954
        %v956 = vlaneseq
        %v957 = vshrl.u32 %v956, 7
        %v958 = vsub.s32 %v955, %v957
        %v959 = vrot.slane %v945, %v958
        %v961 = vpack.i.b16 %v952, %v952
        %v963 = vlaneseq
        %v964 = vshrl.u32 %v963, 7
        %v965 = vsub.s32 0, %v964
        %v966 = vrot.slane %v961, %v965
        %v968 = vpack.i.b16 %v959, %v959
        %v970 = vlaneseq
        %v971 = vshrl.u32 %v970, 7
        %v972 = vsub.s32 0, %v971
        %v973 = vrot.slane %v968, %v972
        %v974 = vmul.bf16 %v930, %v966
        %v975 = vmul.bf16 %v935, %v973
        %976 = vrot.lane.b32.xlu0 %v664, 112
        %v977 = vpop.permute.xlu0 %976
        %978 = vrot.lane.b32.xlu0 %v665, 112
        %v979 = vpop.permute.xlu0 %978
        %vm980 = vcmask 916480
        %v981 = vsel %vm980, %v977, %v979
        %vm983 = vcmask 916480
        %v986 = vsel %vm983, %v979, %v977
        %v990 = vunpack.c.l.s4 1966171168
        %v991 = vunpack.c.0.s8 %v990
        %v992 = vlaneseq
        %v993 = vshrl.u32 %v992, 7
        %v994 = vsub.s32 %v991, %v993
        %v995 = vrot.slane %v658, %v994
        %v996 = vcombine.high %v995, %v995
        %v998 = vunpack.c.l.s4 1966171168
        %v999 = vunpack.c.0.s8 %v998
        %v1000 = vlaneseq
        %v1001 = vshrl.u32 %v1000, 7
        %v1002 = vsub.s32 %v999, %v1001
        %v1003 = vrot.slane %v995, %v1002
        %v1005 = vunpack.c.l.s4 1966171168
        %v1006 = vunpack.c.0.s8 %v1005
        %v1007 = vlaneseq
        %v1008 = vshrl.u32 %v1007, 7
        %v1009 = vsub.s32 %v1006, %v1008
        %v1010 = vrot.slane %v996, %v1009
        %v1012 = vpack.i.b16 %v1003, %v1003
        %v1014 = vlaneseq
        %v1015 = vshrl.u32 %v1014, 7
        %v1016 = vsub.s32 0, %v1015
        %v1017 = vrot.slane %v1012, %v1016
        %v1019 = vpack.i.b16 %v1010, %v1010
        %v1021 = vlaneseq
        %v1022 = vshrl.u32 %v1021, 7
        %v1023 = vsub.s32 0, %v1022
        %v1024 = vrot.slane %v1019, %v1023
        %v1025 = vmul.bf16 %v981, %v1017
        %v1026 = vmul.bf16 %v986, %v1024
        %1027 = vrot.lane.b32.xlu0 %v664, 111
        %v1028 = vpop.permute.xlu0 %1027
        %1029 = vrot.lane.b32.xlu0 %v665, 111
        %v1030 = vpop.permute.xlu0 %1029
        %vm1031 = vcmask 908288
        %v1032 = vsel %vm1031, %v1028, %v1030
        %vm1034 = vcmask 908288
        %v1037 = vsel %vm1034, %v1030, %v1028
        %v1041 = vunpack.c.l.s4 1966171168
        %v1042 = vunpack.c.0.s8 %v1041
        %v1043 = vlaneseq
        %v1044 = vshrl.u32 %v1043, 7
        %v1045 = vsub.s32 %v1042, %v1044
        %v1046 = vrot.slane %v659, %v1045
        %v1047 = vcombine.high %v1046, %v1046
        %v1049 = vunpack.c.l.s4 1966171168
        %v1050 = vunpack.c.0.s8 %v1049
        %v1051 = vlaneseq
        %v1052 = vshrl.u32 %v1051, 7
        %v1053 = vsub.s32 %v1050, %v1052
        %v1054 = vrot.slane %v1046, %v1053
        %v1056 = vunpack.c.l.s4 1966171168
        %v1057 = vunpack.c.0.s8 %v1056
        %v1058 = vlaneseq
        %v1059 = vshrl.u32 %v1058, 7
        %v1060 = vsub.s32 %v1057, %v1059
        %v1061 = vrot.slane %v1047, %v1060
        %v1063 = vpack.i.b16 %v1054, %v1054
        %v1065 = vlaneseq
        %v1066 = vshrl.u32 %v1065, 7
        %v1067 = vsub.s32 0, %v1066
        %v1068 = vrot.slane %v1063, %v1067
        %v1070 = vpack.i.b16 %v1061, %v1061
        %v1072 = vlaneseq
        %v1073 = vshrl.u32 %v1072, 7
        %v1074 = vsub.s32 0, %v1073
        %v1075 = vrot.slane %v1070, %v1074
        %v1076 = vmul.bf16 %v1032, %v1068
        %v1077 = vmul.bf16 %v1037, %v1075
        %v1078 = vld [vmem:[%s5] sm:$0xff]
        %v1079 = vld [vmem:[%s5 + $0x8] sm:$0xff]
        %1081 = vset.pattern.permute.xlu0 0
        %1082 = vperm.xlu0 %1081, %v1078
        %v1083 = vpop.permute.xlu0 %1082
        %1086 = vset.pattern.permute.xlu0 0
        %1087 = vperm.xlu0 %1086, %v1079
        %v1088 = vpop.permute.xlu0 %1087
        %v1092 = vunpack.c.l.b16 %v666
        %v1093 = vunpack.c.h.b16 %v666
        %v1094 = vunpack.c.l.b16 %v667
        %v1095 = vunpack.c.h.b16 %v667
        %v1096 = vpack.c.b16 %v1094, %v1092
        %v1097 = vpack.c.b16 %v1095, %v1093
        %v1100 = vsel %vm728, %v1097, 0
        %1102 = vmatprep.subr.bf16.mxu0 %v1026
        %1103 = vmatpush1.bf16.msra.mxu0 %v1025
        %1104 = vmatprep.subr.bf16.mxu0 %v975
        %1105 = vmatpush1.bf16.msra.mxu0 %v974
        %1106 = vmatprep.subr.bf16.mxu0 %v924
        %1107 = vmatpush1.bf16.msra.mxu0 %v923
        %1108 = vmatprep.subr.bf16.mxu0 %v665
        %1109 = vmatpush1.bf16.msra.mxu0 %v664
        %1110 = vmatprep.subr.bf16.mxu0 %v873
        %1111 = vmatpush1.bf16.msra.mxu0 %v872
        %1112 = vmatprep.subr.bf16.mxu0 %v822
        %1113 = vmatpush1.bf16.msra.mxu0 %v821
        %1114 = vmatprep.subr.bf16.mxu0 %v771
        %1115 = vmatpush1.bf16.msra.mxu0 %v770
        %1116 = vmatprep.subr.bf16.mxu0 %v720
        %1117 = vmatpush1.bf16.msra.mxu0 %v719
        %1118 = vmatprep.subr.bf16.mxu0 0
        %1119 = vmatpush2.bf16.msra.mxu0 0
        %1120 = vmatprep.subr.bf16.mxu0 0
        %1121 = vmatpush2.bf16.msra.mxu0 0
        %1122 = vmatprep.subr.bf16.mxu0 0
        %1123 = vmatpush2.bf16.msra.mxu0 0
        %1124 = vmatprep.subr.bf16.mxu0 0
        %1125 = vmatpush2.bf16.msra.mxu0 0
        %1126 = vmatprep.subr.bf16.mxu0 0
        %1127 = vmatpush2.bf16.msra.mxu0 0
        %1128 = vmatprep.subr.bf16.mxu0 0
        %1129 = vmatpush2.bf16.msra.mxu0 0
        %1130 = vmatprep.subr.bf16.mxu0 0
        %1131 = vmatpush2.bf16.msra.mxu0 0
        %1132 = vmatprep.subr.bf16.mxu0 %v1077
        %1133 = vmatpush2.bf16.msra.mxu0 %v1076
        %1134 = vmatprep.mubr.bf16.mxu0 %v1100
        %1135 = vmatmul.mubr.bf16.gmra.mxu0 %v1096
        %v1136 = vpop.f32.mrf.mxu0
        %v1137 = vadd.f32 %v1083, %v1136
        %v1138 = vpop.f32.mrf.mxu0
        %v1139 = vadd.f32 %v1083, %v1138
        %v1140 = vpop.f32.mrf.mxu0
        %v1141 = vadd.f32 %v1088, %v1140
        %v1142 = vpop.f32.mrf.mxu0
        %v1143 = vadd.f32 %v1088, %v1142
        %1144 = vdwg.mxu0
        %v1145 = vld [vmem:[%s578] sm:$0xff]
        %v1146 = vld [vmem:[%s578 + $0x8] sm:$0xff]
        %v1147 = vld [vmem:[%s578 + $0x10] sm:$0xff]
        %v1148 = vld [vmem:[%s578 + $0x18] sm:$0xff]
        %v1149 = vmul.f32 %v1137, %v1145
        %v1150 = vmul.f32 %v1139, %v1146
        %v1151 = vmul.f32 %v1141, %v1147
        %v1152 = vmul.f32 %v1143, %v1148
        %v1153 = vld [vmem:[%s586] sm:$0xff]
        %v1154 = vld [vmem:[%s586 + $0x8] sm:$0xff]
        %v1155 = vld [vmem:[%s586 + $0x10] sm:$0xff]
        %v1156 = vld [vmem:[%s586 + $0x18] sm:$0xff]
        %v1157 = vadd.f32 %v1149, %v1153
        %v1158 = vadd.f32 %v1150, %v1154
        %v1159 = vadd.f32 %v1151, %v1155
        %v1160 = vadd.f32 %v1152, %v1156
        %v1161 = vadd.f32 %v1157, %v1159
        %v1162 = vrot.slane %v1161, 4
        %v1163 = vadd.f32 %v1161, %v1162
        %v1164 = vrot.slane %v1163, 2
        %v1165 = vadd.f32 %v1163, %v1164
        %v1166 = vrot.slane %v1165, 1
        %v1167 = vadd.f32 %v1165, %v1166
        %v1168 = vadd.f32 %v1158, %v1160
        %v1169 = vrot.slane %v1168, 4
        %v1170 = vadd.f32 %v1168, %v1169
        %v1171 = vrot.slane %v1170, 2
        %v1172 = vadd.f32 %v1170, %v1171
        %v1173 = vrot.slane %v1172, 1
        %v1174 = vadd.f32 %v1172, %v1173
        %v1175 = vmul.f32 %v1157, %v1157
        %v1176 = vmul.f32 %v1158, %v1158
        %v1177 = vmul.f32 %v1159, %v1159
        %v1178 = vmul.f32 %v1160, %v1160
        %v1179 = vadd.f32 %v1175, %v1177
        %v1180 = vrot.slane %v1179, 4
        %v1181 = vadd.f32 %v1179, %v1180
        %v1182 = vrot.slane %v1181, 2
        %v1183 = vadd.f32 %v1181, %v1182
        %v1184 = vrot.slane %v1183, 1
        %v1185 = vadd.f32 %v1183, %v1184
        %v1186 = vadd.f32 %v1176, %v1178
        %v1187 = vrot.slane %v1186, 4
        %v1188 = vadd.f32 %v1186, %v1187
        %v1189 = vrot.slane %v1188, 2
        %v1190 = vadd.f32 %v1188, %v1189
        %v1191 = vrot.slane %v1190, 1
        %v1192 = vadd.f32 %v1190, %v1191
        %v1193 = vadd.f32 %v1167, %v1174
        %1194 = vadd.xlane.f32.xlu0 %v1193
        %v1195 = vpop.xlane.xlu0 %1194
        %v1196 = vadd.f32 %v1185, %v1192
        %1197 = vadd.xlane.f32.xlu0 %v1196
        %v1198 = vpop.xlane.xlu0 %1197
        %v1199 = vrcp.pop 2048.0
        %v1200 = vmul.f32 %v1195, %v1199
        %v1201 = vmul.f32 %v1198, %v1199
        %v1202 = vmul.f32 %v1200, %v1200
        %v1203 = vsub.f32 %v1201, %v1202
        %v1204 = vadd.f32 %v1203, 1e-05
        %v1205 = vrsqrt.pop %v1204
        %v1206 = vsub.f32 %v1157, %v1200
        %v1207 = vsub.f32 %v1158, %v1200
        %v1208 = vsub.f32 %v1159, %v1200
        %v1209 = vsub.f32 %v1160, %v1200
        %v1210 = vmul.f32 %v1206, %v1205
        %v1211 = vmul.f32 %v1207, %v1205
        %v1212 = vmul.f32 %v1208, %v1205
        %v1213 = vmul.f32 %v1209, %v1205
        %v1214 = vld [vmem:[%s6] sm:$0xff]
        %v1215 = vld [vmem:[%s6 + $0x8] sm:$0xff]
        %1217 = vset.pattern.permute.xlu0 0
        %1218 = vperm.xlu0 %1217, %v1214
        %v1219 = vpop.permute.xlu0 %1218
        %1222 = vset.pattern.permute.xlu0 0
        %1223 = vperm.xlu0 %1222, %v1215
        %v1224 = vpop.permute.xlu0 %1223
        %v1226 = vmul.f32 %v1210, %v1219
        %v1227 = vmul.f32 %v1211, %v1219
        %v1228 = vmul.f32 %v1212, %v1224
        %v1229 = vmul.f32 %v1213, %v1224
        %v1230 = vld [vmem:[%s7] sm:$0xff]
        %v1231 = vld [vmem:[%s7 + $0x8] sm:$0xff]
        %1233 = vset.pattern.permute.xlu0 0
        %1234 = vperm.xlu0 %1233, %v1230
        %v1235 = vpop.permute.xlu0 %1234
        %1238 = vset.pattern.permute.xlu0 0
        %1239 = vperm.xlu0 %1238, %v1231
        %v1240 = vpop.permute.xlu0 %1239
        %v1242 = vadd.f32 %v1226, %v1235
        %v1243 = vadd.f32 %v1227, %v1235
        %v1244 = vadd.f32 %v1228, %v1240
        %v1245 = vadd.f32 %v1229, %v1240
        %v1246 = vpack.c.bf16 %v1244, %v1242
        %v1247 = vpack.c.bf16 %v1245, %v1243
        %v1248 = vld [vmem:[%s8] sm:$0xff]
        %v1249 = vld [vmem:[%s8 + $0x8] sm:$0xff]
        %1251 = vrot.lane.b32.xlu0 %v1247, 17
        %v1252 = vpop.permute.xlu0 %1251
        %1254 = vrot.lane.b32.xlu0 %v1246, 17
        %v1255 = vpop.permute.xlu0 %1254
        %v1256 = vsel %vm674, %v1255, %v1252
        %v1260 = vsel %vm677, %v1252, %v1255
        %v1262 = vmul.bf16 %v1260, %v711
        %v1263 = vmul.bf16 %v1256, %v718
        %1264 = vrot.lane.b32.xlu0 %v1247, 16
        %v1265 = vpop.permute.xlu0 %1264
        %1266 = vrot.lane.b32.xlu0 %v1246, 16
        %v1267 = vpop.permute.xlu0 %1266
        %v1268 = vsel %vm725, %v1267, %v1265
        %v1272 = vsel %vm728, %v1265, %v1267
        %v1274 = vmul.bf16 %v1272, %v762
        %v1275 = vmul.bf16 %v1268, %v769
        %1276 = vrot.lane.b32.xlu0 %v1247, 15
        %v1277 = vpop.permute.xlu0 %1276
        %1278 = vrot.lane.b32.xlu0 %v1246, 15
        %v1279 = vpop.permute.xlu0 %1278
        %v1280 = vsel %vm776, %v1279, %v1277
        %v1284 = vsel %vm779, %v1277, %v1279
        %v1286 = vmul.bf16 %v1284, %v813
        %v1287 = vmul.bf16 %v1280, %v820
        %1288 = vrot.lane.b32.xlu0 %v1247, 1
        %v1289 = vpop.permute.xlu0 %1288
        %1290 = vrot.lane.b32.xlu0 %v1246, 1
        %v1291 = vpop.permute.xlu0 %1290
        %v1292 = vsel %vm827, %v1291, %v1289
        %v1296 = vsel %vm830, %v1289, %v1291
        %v1298 = vmul.bf16 %v1296, %v864
        %v1299 = vmul.bf16 %v1292, %v871
        %1300 = vrot.lane.b32.xlu0 %v1246, 127
        %v1301 = vpop.permute.xlu0 %1300
        %1302 = vrot.lane.b32.xlu0 %v1247, 127
        %v1303 = vpop.permute.xlu0 %1302
        %v1304 = vsel %vm878, %v1301, %v1303
        %v1308 = vsel %vm881, %v1303, %v1301
        %v1310 = vmul.bf16 %v1304, %v915
        %v1311 = vmul.bf16 %v1308, %v922
        %1312 = vrot.lane.b32.xlu0 %v1246, 113
        %v1313 = vpop.permute.xlu0 %1312
        %1314 = vrot.lane.b32.xlu0 %v1247, 113
        %v1315 = vpop.permute.xlu0 %1314
        %v1316 = vsel %vm929, %v1313, %v1315
        %v1320 = vsel %vm932, %v1315, %v1313
        %v1322 = vmul.bf16 %v1316, %v966
        %v1323 = vmul.bf16 %v1320, %v973
        %1324 = vrot.lane.b32.xlu0 %v1246, 112
        %v1325 = vpop.permute.xlu0 %1324
        %1326 = vrot.lane.b32.xlu0 %v1247, 112
        %v1327 = vpop.permute.xlu0 %1326
        %v1328 = vsel %vm980, %v1325, %v1327
        %v1332 = vsel %vm983, %v1327, %v1325
        %v1334 = vmul.bf16 %v1328, %v1017
        %v1335 = vmul.bf16 %v1332, %v1024
        %1336 = vrot.lane.b32.xlu0 %v1246, 111
        %v1337 = vpop.permute.xlu0 %1336
        %1338 = vrot.lane.b32.xlu0 %v1247, 111
        %v1339 = vpop.permute.xlu0 %1338
        %v1340 = vsel %vm1031, %v1337, %v1339
        %v1344 = vsel %vm1034, %v1339, %v1337
        %v1346 = vmul.bf16 %v1340, %v1068
        %v1347 = vmul.bf16 %v1344, %v1075
        %v1348 = vld [vmem:[%s9] sm:$0xff]
        %v1349 = vld [vmem:[%s9 + $0x8] sm:$0xff]
        %1351 = vset.pattern.permute.xlu0 0
        %1352 = vperm.xlu0 %1351, %v1348
        %v1353 = vpop.permute.xlu0 %1352
        %1356 = vset.pattern.permute.xlu0 0
        %1357 = vperm.xlu0 %1356, %v1349
        %v1358 = vpop.permute.xlu0 %1357
        %v1362 = vunpack.c.l.b16 %v1248
        %v1363 = vunpack.c.h.b16 %v1248
        %v1364 = vunpack.c.l.b16 %v1249
        %v1365 = vunpack.c.h.b16 %v1249
        %v1366 = vpack.c.b16 %v1364, %v1362
        %v1367 = vpack.c.b16 %v1365, %v1363
        %v1370 = vsel %vm728, %v1367, 0
        %1372 = vmatprep.subr.bf16.mxu0 %v1335
        %1373 = vmatpush1.bf16.msra.mxu0 %v1334
        %1374 = vmatprep.subr.bf16.mxu0 %v1323
        %1375 = vmatpush1.bf16.msra.mxu0 %v1322
        %1376 = vmatprep.subr.bf16.mxu0 %v1311
        %1377 = vmatpush1.bf16.msra.mxu0 %v1310
        %1378 = vmatprep.subr.bf16.mxu0 %v1247
        %1379 = vmatpush1.bf16.msra.mxu0 %v1246
        %1380 = vmatprep.subr.bf16.mxu0 %v1299
        %1381 = vmatpush1.bf16.msra.mxu0 %v1298
        %1382 = vmatprep.subr.bf16.mxu0 %v1287
        %1383 = vmatpush1.bf16.msra.mxu0 %v1286
        %1384 = vmatprep.subr.bf16.mxu0 %v1275
        %1385 = vmatpush1.bf16.msra.mxu0 %v1274
        %1386 = vmatprep.subr.bf16.mxu0 %v1263
        %1387 = vmatpush1.bf16.msra.mxu0 %v1262
        %1388 = vmatprep.subr.bf16.mxu0 0
        %1389 = vmatpush2.bf16.msra.mxu0 0
        %1390 = vmatprep.subr.bf16.mxu0 0
        %1391 = vmatpush2.bf16.msra.mxu0 0
        %1392 = vmatprep.subr.bf16.mxu0 0
        %1393 = vmatpush2.bf16.msra.mxu0 0
        %1394 = vmatprep.subr.bf16.mxu0 0
        %1395 = vmatpush2.bf16.msra.mxu0 0
        %1396 = vmatprep.subr.bf16.mxu0 0
        %1397 = vmatpush2.bf16.msra.mxu0 0
        %1398 = vmatprep.subr.bf16.mxu0 0
        %1399 = vmatpush2.bf16.msra.mxu0 0
        %1400 = vmatprep.subr.bf16.mxu0 0
        %1401 = vmatpush2.bf16.msra.mxu0 0
        %1402 = vmatprep.subr.bf16.mxu0 %v1347
        %1403 = vmatpush2.bf16.msra.mxu0 %v1346
        %1404 = vmatprep.mubr.bf16.mxu0 %v1370
        %1405 = vmatmul.mubr.bf16.gmra.mxu0 %v1366
        %v1406 = vpop.f32.mrf.mxu0
        %v1407 = vadd.f32 %v1353, %v1406
        %v1408 = vpop.f32.mrf.mxu0
        %v1409 = vadd.f32 %v1353, %v1408
        %v1410 = vpop.f32.mrf.mxu0
        %v1411 = vadd.f32 %v1358, %v1410
        %v1412 = vpop.f32.mrf.mxu0
        %v1413 = vadd.f32 %v1358, %v1412
        %1414 = vdwg.mxu0
        %v1415 = vmul.f32 %v1407, 0.5
        %v1416 = vmul.f32 %v1409, 0.5
        %v1417 = vmul.f32 %v1411, 0.5
        %v1418 = vmul.f32 %v1413, 0.5
        %v1419 = vmul.f32 %v1407, 0.044715
        %v1420 = vmul.f32 %v1409, 0.044715
        %v1421 = vmul.f32 %v1411, 0.044715
        %v1422 = vmul.f32 %v1413, 0.044715
        %v1423 = vmul.f32 %v1419, %v1407
        %v1424 = vmul.f32 %v1420, %v1409
        %v1425 = vmul.f32 %v1421, %v1411
        %v1426 = vmul.f32 %v1422, %v1413
        %v1427 = vmul.f32 %v1423, %v1407
        %v1428 = vmul.f32 %v1424, %v1409
        %v1429 = vmul.f32 %v1425, %v1411
        %v1430 = vmul.f32 %v1426, %v1413
        %v1431 = vadd.f32 %v1407, %v1427
        %v1432 = vadd.f32 %v1409, %v1428
        %v1433 = vadd.f32 %v1411, %v1429
        %v1434 = vadd.f32 %v1413, %v1430
        %v1435 = vmul.f32 %v1431, 0.7978846
        %v1436 = vmul.f32 %v1432, 0.7978846
        %v1437 = vmul.f32 %v1433, 0.7978846
        %v1438 = vmul.f32 %v1434, 0.7978846
        %v1439 = vtanh.pop %v1435
        %v1440 = vtanh.pop %v1436
        %v1441 = vtanh.pop %v1437
        %v1442 = vtanh.pop %v1438
        %v1443 = vadd.f32 %v1439, 1.0
        %v1444 = vadd.f32 %v1440, 1.0
        %v1445 = vadd.f32 %v1441, 1.0
        %v1446 = vadd.f32 %v1442, 1.0
        %v1447 = vmul.f32 %v1415, %v1443
        %v1448 = vmul.f32 %v1416, %v1444
        %v1449 = vmul.f32 %v1417, %v1445
        %v1450 = vmul.f32 %v1418, %v1446
        %v1451 = vadd.f32 %v1447, %v1449
        %v1452 = vrot.slane %v1451, 4
        %v1453 = vadd.f32 %v1451, %v1452
        %v1454 = vrot.slane %v1453, 2
        %v1455 = vadd.f32 %v1453, %v1454
        %v1456 = vrot.slane %v1455, 1
        %v1457 = vadd.f32 %v1455, %v1456
        %v1458 = vadd.f32 %v1448, %v1450
        %v1459 = vrot.slane %v1458, 4
        %v1460 = vadd.f32 %v1458, %v1459
        %v1461 = vrot.slane %v1460, 2
        %v1462 = vadd.f32 %v1460, %v1461
        %v1463 = vrot.slane %v1462, 1
        %v1464 = vadd.f32 %v1462, %v1463
        %v1465 = vmul.f32 %v1447, %v1447
        %v1466 = vmul.f32 %v1448, %v1448
        %v1467 = vmul.f32 %v1449, %v1449
        %v1468 = vmul.f32 %v1450, %v1450
        %v1469 = vadd.f32 %v1465, %v1467
        %v1470 = vrot.slane %v1469, 4
        %v1471 = vadd.f32 %v1469, %v1470
        %v1472 = vrot.slane %v1471, 2
        %v1473 = vadd.f32 %v1471, %v1472
        %v1474 = vrot.slane %v1473, 1
        %v1475 = vadd.f32 %v1473, %v1474
        %v1476 = vadd.f32 %v1466, %v1468
        %v1477 = vrot.slane %v1476, 4
        %v1478 = vadd.f32 %v1476, %v1477
        %v1479 = vrot.slane %v1478, 2
        %v1480 = vadd.f32 %v1478, %v1479
        %v1481 = vrot.slane %v1480, 1
        %v1482 = vadd.f32 %v1480, %v1481
        %v1483 = vadd.f32 %v1457, %v1464
        %1484 = vadd.xlane.f32.xlu0 %v1483
        %v1485 = vpop.xlane.xlu0 %1484
        %v1486 = vadd.f32 %v1475, %v1482
        %1487 = vadd.xlane.f32.xlu0 %v1486
        %v1488 = vpop.xlane.xlu0 %1487
        %v1489 = vrcp.pop 4096.0
        %v1490 = vmul.f32 %v1485, %v1489
        %v1491 = vmul.f32 %v1488, %v1489
        %v1492 = vmul.f32 %v1490, %v1490
        %v1493 = vsub.f32 %v1491, %v1492
        %v1494 = vadd.f32 %v1493, 1e-05
        %v1495 = vrsqrt.pop %v1494
        %v1496 = vsub.f32 %v1447, %v1490
        %v1497 = vsub.f32 %v1448, %v1490
        %v1498 = vsub.f32 %v1449, %v1490
        %v1499 = vsub.f32 %v1450, %v1490
        %v1500 = vmul.f32 %v1496, %v1495
        %v1501 = vmul.f32 %v1497, %v1495
        %v1502 = vmul.f32 %v1498, %v1495
        %v1503 = vmul.f32 %v1499, %v1495
        %v1504 = vld [vmem:[%s10] sm:$0xff]
        %v1505 = vld [vmem:[%s10 + $0x8] sm:$0xff]
        %1507 = vset.pattern.permute.xlu0 0
        %1508 = vperm.xlu0 %1507, %v1504
        %v1509 = vpop.permute.xlu0 %1508
        %1512 = vset.pattern.permute.xlu0 0
        %1513 = vperm.xlu0 %1512, %v1505
        %v1514 = vpop.permute.xlu0 %1513
        %v1516 = vmul.f32 %v1500, %v1509
        %v1517 = vmul.f32 %v1501, %v1509
        %v1518 = vmul.f32 %v1502, %v1514
        %v1519 = vmul.f32 %v1503, %v1514
        %v1520 = vld [vmem:[%s11] sm:$0xff]
        %v1521 = vld [vmem:[%s11 + $0x8] sm:$0xff]
        %1523 = vset.pattern.permute.xlu0 0
        %1524 = vperm.xlu0 %1523, %v1520
        %v1525 = vpop.permute.xlu0 %1524
        %1528 = vset.pattern.permute.xlu0 0
        %1529 = vperm.xlu0 %1528, %v1521
        %v1530 = vpop.permute.xlu0 %1529
        %v1532 = vadd.f32 %v1516, %v1525
        %v1533 = vadd.f32 %v1517, %v1525
        %v1534 = vadd.f32 %v1518, %v1530
        %v1535 = vadd.f32 %v1519, %v1530
        %v1536 = vpack.c.bf16 %v1534, %v1532
        %v1537 = vpack.c.bf16 %v1535, %v1533
        %v1538 = vld [vmem:[#allocation7] sm:$0xff]
        %v1539 = vld [vmem:[#allocation7 + $0x8] sm:$0xff]
        %1541 = vrot.lane.b32.xlu0 %v1537, 17
        %v1542 = vpop.permute.xlu0 %1541
        %1544 = vrot.lane.b32.xlu0 %v1536, 17
        %v1545 = vpop.permute.xlu0 %1544
        %v1546 = vsel %vm674, %v1545, %v1542
        %v1550 = vsel %vm677, %v1542, %v1545
        %v1552 = vmul.bf16 %v1550, %v711
        %v1553 = vmul.bf16 %v1546, %v718
        %1554 = vrot.lane.b32.xlu0 %v1537, 16
        %v1555 = vpop.permute.xlu0 %1554
        %1556 = vrot.lane.b32.xlu0 %v1536, 16
        %v1557 = vpop.permute.xlu0 %1556
        %v1558 = vsel %vm725, %v1557, %v1555
        %v1562 = vsel %vm728, %v1555, %v1557
        %v1564 = vmul.bf16 %v1562, %v762
        %v1565 = vmul.bf16 %v1558, %v769
        %1566 = vrot.lane.b32.xlu0 %v1537, 15
        %v1567 = vpop.permute.xlu0 %1566
        %1568 = vrot.lane.b32.xlu0 %v1536, 15
        %v1569 = vpop.permute.xlu0 %1568
        %v1570 = vsel %vm776, %v1569, %v1567
        %v1574 = vsel %vm779, %v1567, %v1569
        %v1576 = vmul.bf16 %v1574, %v813
        %v1577 = vmul.bf16 %v1570, %v820
        %1578 = vrot.lane.b32.xlu0 %v1537, 1
        %v1579 = vpop.permute.xlu0 %1578
        %1580 = vrot.lane.b32.xlu0 %v1536, 1
        %v1581 = vpop.permute.xlu0 %1580
        %v1582 = vsel %vm827, %v1581, %v1579
        %v1586 = vsel %vm830, %v1579, %v1581
        %v1588 = vmul.bf16 %v1586, %v864
        %v1589 = vmul.bf16 %v1582, %v871
        %1590 = vrot.lane.b32.xlu0 %v1536, 127
        %v1591 = vpop.permute.xlu0 %1590
        %1592 = vrot.lane.b32.xlu0 %v1537, 127
        %v1593 = vpop.permute.xlu0 %1592
        %v1594 = vsel %vm878, %v1591, %v1593
        %v1598 = vsel %vm881, %v1593, %v1591
        %v1600 = vmul.bf16 %v1594, %v915
        %v1601 = vmul.bf16 %v1598, %v922
        %1602 = vrot.lane.b32.xlu0 %v1536, 113
        %v1603 = vpop.permute.xlu0 %1602
        %1604 = vrot.lane.b32.xlu0 %v1537, 113
        %v1605 = vpop.permute.xlu0 %1604
        %v1606 = vsel %vm929, %v1603, %v1605
        %v1610 = vsel %vm932, %v1605, %v1603
        %v1612 = vmul.bf16 %v1606, %v966
        %v1613 = vmul.bf16 %v1610, %v973
        %1614 = vrot.lane.b32.xlu0 %v1536, 112
        %v1615 = vpop.permute.xlu0 %1614
        %1616 = vrot.lane.b32.xlu0 %v1537, 112
        %v1617 = vpop.permute.xlu0 %1616
        %v1618 = vsel %vm980, %v1615, %v1617
        %v1622 = vsel %vm983, %v1617, %v1615
        %v1624 = vmul.bf16 %v1618, %v1017
        %v1625 = vmul.bf16 %v1622, %v1024
        %1626 = vrot.lane.b32.xlu0 %v1536, 111
        %v1627 = vpop.permute.xlu0 %1626
        %1628 = vrot.lane.b32.xlu0 %v1537, 111
        %v1629 = vpop.permute.xlu0 %1628
        %v1630 = vsel %vm1031, %v1627, %v1629
        %v1634 = vsel %vm1034, %v1629, %v1627
        %v1636 = vmul.bf16 %v1630, %v1068
        %v1637 = vmul.bf16 %v1634, %v1075
        %v1638 = vld [vmem:[%s13] sm:$0xff]
        %v1639 = vld [vmem:[%s13 + $0x8] sm:$0xff]
        %1641 = vset.pattern.permute.xlu0 0
        %1642 = vperm.xlu0 %1641, %v1638
        %v1643 = vpop.permute.xlu0 %1642
        %1646 = vset.pattern.permute.xlu0 0
        %1647 = vperm.xlu0 %1646, %v1639
        %v1648 = vpop.permute.xlu0 %1647
        %v1652 = vunpack.c.l.b16 %v1538
        %v1653 = vunpack.c.h.b16 %v1538
        %v1654 = vunpack.c.l.b16 %v1539
        %v1655 = vunpack.c.h.b16 %v1539
        %v1656 = vpack.c.b16 %v1654, %v1652
        %v1657 = vpack.c.b16 %v1655, %v1653
        %v1660 = vsel %vm728, %v1657, 0
        %1662 = vmatprep.subr.bf16.mxu0 %v1625
        %1663 = vmatpush1.bf16.msra.mxu0 %v1624
        %1664 = vmatprep.subr.bf16.mxu0 %v1613
        %1665 = vmatpush1.bf16.msra.mxu0 %v1612
        %1666 = vmatprep.subr.bf16.mxu0 %v1601
        %1667 = vmatpush1.bf16.msra.mxu0 %v1600
        %1668 = vmatprep.subr.bf16.mxu0 %v1537
        %1669 = vmatpush1.bf16.msra.mxu0 %v1536
        %1670 = vmatprep.subr.bf16.mxu0 %v1589
        %1671 = vmatpush1.bf16.msra.mxu0 %v1588
        %1672 = vmatprep.subr.bf16.mxu0 %v1577
        %1673 = vmatpush1.bf16.msra.mxu0 %v1576
        %1674 = vmatprep.subr.bf16.mxu0 %v1565
        %1675 = vmatpush1.bf16.msra.mxu0 %v1564
        %1676 = vmatprep.subr.bf16.mxu0 %v1553
        %1677 = vmatpush1.bf16.msra.mxu0 %v1552
        %1678 = vmatprep.subr.bf16.mxu0 0
        %1679 = vmatpush2.bf16.msra.mxu0 0
        %1680 = vmatprep.subr.bf16.mxu0 0
        %1681 = vmatpush2.bf16.msra.mxu0 0
        %1682 = vmatprep.subr.bf16.mxu0 0
        %1683 = vmatpush2.bf16.msra.mxu0 0
        %1684 = vmatprep.subr.bf16.mxu0 0
        %1685 = vmatpush2.bf16.msra.mxu0 0
        %1686 = vmatprep.subr.bf16.mxu0 0
        %1687 = vmatpush2.bf16.msra.mxu0 0
        %1688 = vmatprep.subr.bf16.mxu0 0
        %1689 = vmatpush2.bf16.msra.mxu0 0
        %1690 = vmatprep.subr.bf16.mxu0 0
        %1691 = vmatpush2.bf16.msra.mxu0 0
        %1692 = vmatprep.subr.bf16.mxu0 %v1637
        %1693 = vmatpush2.bf16.msra.mxu0 %v1636
        %1694 = vmatprep.mubr.bf16.mxu0 %v1660
        %1695 = vmatmul.mubr.bf16.gmra.mxu0 %v1656
        %v1696 = vpop.f32.mrf.mxu0
        %v1697 = vadd.f32 %v1643, %v1696
        %v1698 = vpop.f32.mrf.mxu0
        %v1699 = vadd.f32 %v1643, %v1698
        %v1700 = vpop.f32.mrf.mxu0
        %v1701 = vadd.f32 %v1648, %v1700
        %v1702 = vpop.f32.mrf.mxu0
        %v1703 = vadd.f32 %v1648, %v1702
        %1704 = vdwg.mxu0
        %v1705 = vld [vmem:[%s14] sm:$0xf]
        %v1706 = vld [vmem:[%s14 + $0x4] sm:$0xf]
        %v1707 = vld [vmem:[%s15] sm:$0xff]
        %v1708 = vld [vmem:[%s15 + $0x8] sm:$0xff]
        %1710 = vset.pattern.permute.xlu0 0
        %1711 = vperm.xlu0 %1710, %v1707
        %v1712 = vpop.permute.xlu0 %1711
        %1715 = vset.pattern.permute.xlu0 0
        %1716 = vperm.xlu0 %1715, %v1708
        %v1717 = vpop.permute.xlu0 %1716
        %v1721 = vunpack.c.l.b16 %v1705
        %v1722 = vunpack.c.l.b16 %v1706
        %v1723 = vpack.c.b16 %v1722, %v1721
        %v1725 = vsel %vm728, %v1723, 0
        %1727 = vmatprep.subr.bf16.mxu0 0
        %1728 = vmatpush1.bf16.msra.mxu0 0
        %1729 = vmatprep.subr.bf16.mxu0 0
        %1730 = vmatpush1.bf16.msra.mxu0 0
        %1731 = vmatprep.subr.bf16.mxu0 0
        %1732 = vmatpush1.bf16.msra.mxu0 0
        %1733 = vmatprep.subr.bf16.mxu0 0
        %1734 = vmatpush1.bf16.msra.mxu0 0
        %1735 = vmatprep.subr.bf16.mxu0 0
        %1736 = vmatpush1.bf16.msra.mxu0 0
        %1737 = vmatprep.subr.bf16.mxu0 0
        %1738 = vmatpush1.bf16.msra.mxu0 0
        %1739 = vmatprep.subr.bf16.mxu0 0
        %1740 = vmatpush1.bf16.msra.mxu0 0
        %1741 = vmatprep.subr.bf16.mxu0 %v665
        %1742 = vmatpush1.bf16.msra.mxu0 %v664
        %1743 = vmatprep.subr.bf16.mxu0 0
        %1744 = vmatpush2.bf16.msra.mxu0 0
        %1745 = vmatprep.subr.bf16.mxu0 0
        %1746 = vmatpush2.bf16.msra.mxu0 0
        %1747 = vmatprep.subr.bf16.mxu0 0
        %1748 = vmatpush2.bf16.msra.mxu0 0
        %1749 = vmatprep.subr.bf16.mxu0 0
        %1750 = vmatpush2.bf16.msra.mxu0 0
        %1751 = vmatprep.subr.bf16.mxu0 0
        %1752 = vmatpush2.bf16.msra.mxu0 0
        %1753 = vmatprep.subr.bf16.mxu0 0
        %1754 = vmatpush2.bf16.msra.mxu0 0
        %1755 = vmatprep.subr.bf16.mxu0 0
        %1756 = vmatpush2.bf16.msra.mxu0 0
        %1757 = vmatprep.subr.bf16.mxu0 0
        %1758 = vmatpush2.bf16.msra.mxu0 0
        %1759 = vmatprep.mubr.bf16.mxu0 0
        %1760 = vmatmul.mubr.bf16.gmra.mxu0 %v1725
        %v1761 = vpop.f32.mrf.mxu0
        %v1762 = vadd.f32 %v1712, %v1761
        %v1763 = vpop.f32.mrf.mxu0
        %v1764 = vadd.f32 %v1712, %v1763
        %v1765 = vpop.f32.mrf.mxu0
        %v1766 = vadd.f32 %v1717, %v1765
        %v1767 = vpop.f32.mrf.mxu0
        %v1768 = vadd.f32 %v1717, %v1767
        %1769 = vdwg.mxu0
        %v1770 = vadd.f32 %v1697, %v1762
        %v1771 = vadd.f32 %v1699, %v1764
        %v1772 = vadd.f32 %v1701, %v1766
        %v1773 = vadd.f32 %v1703, %v1768
        %1774 = vst [vmem:[%s646] sm:$0xff] %v1770
        %1775 = vst [vmem:[%s646 + $0x8] sm:$0xff] %v1771
        %1776 = vst [vmem:[%s646 + $0x10] sm:$0xff] %v1772
        %1777 = vst [vmem:[%s646 + $0x18] sm:$0xff] %v1773
        %s1778 = sand.u32 %s393, 1
        %s1779 = scalar_lea.sflag [#allocation6], %s1778
        %s1780 = sand.u32 %s393, 1
        %s1781 = smul.addr %s1780, 32
        %s1782 = scalar_lea.vmem [#allocation9], %s1781
        // Predicated region
        $region139: #{tpu_custom_call.1} parent=121 // pred_check
          %p1783 = pneg %p403
        $region140: #{tpu_custom_call.1} parent=121 // pred_check_branch
          %1785 = sbr.rel (%p1783) target = $region142
        $region141: #{tpu_custom_call.1} parent=121 // pred_region
          %s1786 = smul.u32 2, %s34
          %s1788 = ssub.s32 512, 512
          %1789 = vsyncadd %s1779, %s1788
          %s1790 = smul.addr %s1786, 128
          %s1791 = scalar_lea.hbm %s16, %s1790
          %s1792 = sshll.u32 %s1782, 4
          %s1793 = int_to_ptr.vmem [resolvable:$true] %s1792
          %1798 = dma.vmem_to_hbm [thread:$0]  %s1793, 512, %s1791, %s1779, 256, 512, 16
        $region142: #{tpu_custom_call.1} parent=121 // pred_fallthru
          _
      $region122: #{tpu_custom_call.1} parent=5 // pred_fallthru
        _
      %p1799 = scmp.le.s32.totalorder 2, %s29
      // Predicated region
      $region143: #{tpu_custom_call.1} parent=5 // pred_check
        %p1800 = pneg %p1799
      $region144: #{tpu_custom_call.1} parent=5 // pred_check_branch
        %1802 = sbr.rel (%p1800) target = $region146
      $region145: #{tpu_custom_call.1} parent=5 // pred_region
        %s1803 = ssub.s32 %s29, 2
        // Predicated region
        $region147: #{tpu_custom_call.1} parent=145 // pred_check
          %p1804 = pneg %p409
        $region148: #{tpu_custom_call.1} parent=145 // pred_check_branch
          %1806 = sbr.rel (%p1804) target = $region150
        $region149: #{tpu_custom_call.1} parent=145 // pred_region
          %s1807 = sand.u32 %s394, 1
          %s1808 = scalar_lea.sflag [#allocation6], %s1807
          %s1809 = sand.u32 %s394, 1
          %s1810 = smul.addr %s1809, 32
          %s1811 = scalar_lea.vmem [#allocation9], %s1810
          %1812 = dma.done %s1808, 512
        $region150: #{tpu_custom_call.1} parent=145 // pred_fallthru
          _
      $region146: #{tpu_custom_call.1} parent=5 // pred_fallthru
        _
    $region6: #{tpu_custom_call.1} parent=1 // loop_footer
      %s33 = sadd.s32 1, %s29
    $region7: #{tpu_custom_call.1} parent=1 // loop_footer_branch
      %28 = sbr.rel target = $region3
    $region8: #{tpu_custom_call.1} parent=1 // loop_exit
      _
    %1813 = vsyncpa [#allocation5], 1
    %s1814 = scalar_lea.sflag [#allocation5], 1
    %1815 = vsyncpa %s1814, 1
    %1816 = vsyncpa [#allocation8], 1
    %1817 = vsyncpa [#allocation6], 1
    %s1818 = scalar_lea.sflag [#allocation6], 1
    %1819 = vsyncpa %s1818, 1

</llo_original>
